<compile_context>
chip_gen: v7x
topology: tpu7x:2x2x1
jax: 0.10.0
libtpu: 0.0.40
codegen_flags: <defaults>
</compile_context>

<pallas_src>
import math

import jax
import jax.numpy as jnp
from jax import lax
from jax.experimental import pallas as pl
from jax.experimental.pallas import tpu as pltpu

Z_DIM = 32
HIDDEN = (512, 512, 128, 64, 1)


def _cdiv(a, b):
    return -(-a // b)


def _round_up(x, m):
    return (x + m - 1) // m * m


def _mlp_kernel(x_ref,
                w1_ref, b1_ref,
                w2_ref, b2_ref,
                w3_ref, b3_ref,
                w4_ref, b4_ref,
                w5_ref, b5_ref,
                o_ref):
    # Matmuls: bf16 operands on the MXU with f32 accumulation.
    # Bias + ReLU: f32 on the VPU.
    # TODO(synk): layer 1 (K=32) only fills part of the MXU depth; if the
    # kernel ever measures MXU-bound on v6e/v7x it could be rewritten as a
    # VPU broadcast-accumulate over the 32 input features.
    h = jnp.dot(x_ref[...].astype(jnp.bfloat16), w1_ref[...],
                preferred_element_type=jnp.float32)
    h = jnp.maximum(h + b1_ref[...], 0.0)

    h = jnp.dot(h.astype(jnp.bfloat16), w2_ref[...],
                preferred_element_type=jnp.float32)
    h = jnp.maximum(h + b2_ref[...], 0.0)

    h = jnp.dot(h.astype(jnp.bfloat16), w3_ref[...],
                preferred_element_type=jnp.float32)
    h = jnp.maximum(h + b3_ref[...], 0.0)

    h = jnp.dot(h.astype(jnp.bfloat16), w4_ref[...],
                preferred_element_type=jnp.float32)
    h = jnp.maximum(h + b4_ref[...], 0.0)

    # Final 64 -> 1 layer, emitted lane-dense: contract the (1, 64) weight row
    # against the feature axis of h (same q@k^T dot_general pattern as flash
    # attention), producing a (1, tb) logit row so the output store is a
    # full-lane vst instead of masked single-lane stores.
    logit_row = lax.dot_general(
        w5_ref[...], h.astype(jnp.bfloat16),
        dimension_numbers=(((1,), (1,)), ((), ())),
        preferred_element_type=jnp.float32)              # (1, tb)
    o_ref[...] = (logit_row + b5_ref[...]).reshape(o_ref.shape).astype(o_ref.dtype)


def _choose_batch_tile(B, batch_tile, min_steps=4):
    # Keep at least `min_steps` grid steps when the batch allows it (so the
    # "parallel" axis can shard across v7x's two TensorCores and the software
    # pipeline has depth) while still using large tiles for big batches to
    # amortize the ~0.35us/step grid overhead.
    tb = max(8, _round_up(_cdiv(B, min_steps), 8))
    return min(_round_up(batch_tile, 8), tb)


def discriminator_forward(x, params, *, batch_tile=1024):
    """x: (B, Z_DIM) float32 -> logits (B, 1) float32."""
    B, zin = x.shape
    assert zin == Z_DIM

    tb = _choose_batch_tile(B, batch_tile)
    assert tb % 8 == 0, "batch tile must respect the (8,128) sublane rule"

    # Pad only to the sublane multiple (8) -- a tiny copy -- and let Pallas
    # handle the ragged last batch tile (grid = cdiv) instead of a full
    # zero-pad of x to a multiple of the batch tile.
    B8 = _round_up(B, 8)
    if B8 != B:
        x = jnp.concatenate([x, jnp.zeros((B8 - B, zin), x.dtype)], axis=0)

    num_tiles = _cdiv(B8, tb)

    (w1, b1), (w2, b2), (w3, b3), (w4, b4), (w5, b5) = params
    # Last-layer weight as a (1, 64) row for the lane-dense contraction.
    w5_row = jnp.reshape(w5, (1, w5.shape[0]))
    weight_args = (w1, b1, w2, b2, w3, b3, w4, b4, w5_row, b5)

    # Weights/biases (~0.7 MiB in bf16) stay fully VMEM resident; the constant
    # (0, ...) block index means they are DMA'd once, not once per batch tile.
    # (pl.Buffered(1) would shave the redundant second buffer; left at the
    # default double-buffer for lowering robustness -- it is < 1 MiB.)
    def full_spec(arr):
        nd = arr.ndim
        return pl.BlockSpec(arr.shape, lambda i, _nd=nd: (0,) * _nd)

    grid = (num_tiles,)
    in_specs = [pl.BlockSpec((tb, Z_DIM), lambda i: (i, 0))]
    in_specs += [full_spec(a) for a in weight_args]
    # Lane-dense output slab: one (1, 1, tb) row per grid step; the wrapper
    # reshapes it back to (B, 1).
    out_spec = pl.BlockSpec((1, 1, tb), lambda i: (i, 0, 0))

    flops = 2 * num_tiles * tb * (
        Z_DIM * 512 + 512 * 512 + 512 * 128 + 128 * 64 + 64 * 1)
    weight_bytes = sum(int(a.size) * a.dtype.itemsize for a in weight_args)
    bytes_accessed = weight_bytes + num_tiles * tb * (Z_DIM * 4 + 4)

    out = pl.pallas_call(
        _mlp_kernel,
        out_shape=jax.ShapeDtypeStruct((num_tiles, 1, tb), jnp.float32),
        grid_spec=pltpu.PrefetchScalarGridSpec(
            num_scalar_prefetch=0,
            grid=grid,
            in_specs=in_specs,
            out_specs=out_spec,
        ),
        compiler_params=pltpu.CompilerParams(
            dimension_semantics=("parallel",),
            # Actual footprint is well under 16 MiB even at tb=2048; 32 MiB
            # leaves headroom on every generation (v7x has only 64 MiB/TC).
            vmem_limit_bytes=32 * 1024 * 1024,
        ),
        cost_estimate=pl.CostEstimate(
            flops=flops, transcendentals=0, bytes_accessed=bytes_accessed),
    )(x, *weight_args)

    # (num_tiles, 1, tb) -> (num_tiles*tb, 1); row t*tb + j is batch row
    # t*tb + j, padded/ragged rows land past B and are sliced off.
    return out.reshape(num_tiles * tb, 1)[:B]


def init_params(key):
    """PyTorch-style U(-1/sqrt(fan_in), +1/sqrt(fan_in)); weights stored bf16."""
    params = []
    fan_in = Z_DIM
    for fan_out in HIDDEN:
        key, kw, kb = jax.random.split(key, 3)
        bound = 1.0 / math.sqrt(float(fan_in))
        w = jax.random.uniform(kw, (fan_in, fan_out), jnp.float32,
                               minval=-bound, maxval=bound).astype(jnp.bfloat16)
        b = jax.random.uniform(kb, (1, fan_out), jnp.float32,
                               minval=-bound, maxval=bound)
        params.append((w, b))
        fan_in = fan_out
    return params


def _reference_forward(x, params):
    h = x
    for i, (w, b) in enumerate(params):
        h = h @ w.astype(jnp.float32) + b
        if i < len(params) - 1:
            h = jnp.maximum(h, 0.0)
    return h


if __name__ == "__main__":
    key = jax.random.PRNGKey(0)
    key, kx = jax.random.split(key)
    params = init_params(key)

    # Small single-tile smoke test (B=8).
    B = 8
    x = jax.random.normal(kx, (B, Z_DIM), jnp.float32)
    out = jax.block_until_ready(discriminator_forward(x, params))
    ref = _reference_forward(x, params)
    assert out.shape == (B, 1), out.shape
    # bf16 matmul operands (f32 accumulation) -> widened tolerance.
    assert jnp.allclose(out, ref, atol=5e-2, rtol=5e-2), (out, ref)

    # Multi-tile + ragged-last-block path (B=300 -> tb=80, grid=4).
    key, kx2 = jax.random.split(key)
    B2 = 300
    x2 = jax.random.normal(kx2, (B2, Z_DIM), jnp.float32)
    out2 = jax.block_until_ready(discriminator_forward(x2, params))
    ref2 = _reference_forward(x2, params)
    assert out2.shape == (B2, 1), out2.shape
    assert jnp.allclose(out2, ref2, atol=5e-2, rtol=5e-2), (out2, ref2)

    print("KERNEL_OK")
</pallas_src>

<mosaic_0001>
module attributes {stable_mosaic.version = 11 : i64} {
  func.func @_mlp_kernel(%arg0: i32, %arg1: memref<8x32xf32, #tpu.memory_space<vmem>>, %arg2: memref<32x512xbf16, #tpu.memory_space<vmem>>, %arg3: memref<1x512xf32, #tpu.memory_space<vmem>>, %arg4: memref<512x512xbf16, #tpu.memory_space<vmem>>, %arg5: memref<1x512xf32, #tpu.memory_space<vmem>>, %arg6: memref<512x128xbf16, #tpu.memory_space<vmem>>, %arg7: memref<1x128xf32, #tpu.memory_space<vmem>>, %arg8: memref<128x64xbf16, #tpu.memory_space<vmem>>, %arg9: memref<1x64xf32, #tpu.memory_space<vmem>>, %arg10: memref<1x64xbf16, #tpu.memory_space<vmem>>, %arg11: memref<1x1xf32, #tpu.memory_space<vmem>>, %arg12: memref<1x1x8xf32, #tpu.memory_space<vmem>>) attributes {dimension_semantics = [#tpu.dimension_semantics<parallel>], iteration_bounds = array<i64: 1>, scalar_prefetch = 0 : i64, scratch_operands = 0 : i64, tpu.core_type = #tpu.core_type<tc>, window_params = [{transform_indices = @transform_0, window_bounds = array<i64: 8, 32>}, {pipeline_mode = #tpu.pipeline_mode<synchronous>, transform_indices = @transform_1, window_bounds = array<i64: 32, 512>}, {pipeline_mode = #tpu.pipeline_mode<synchronous>, transform_indices = @transform_2, window_bounds = array<i64: 1, 512>}, {pipeline_mode = #tpu.pipeline_mode<synchronous>, transform_indices = @transform_3, window_bounds = array<i64: 512, 512>}, {pipeline_mode = #tpu.pipeline_mode<synchronous>, transform_indices = @transform_4, window_bounds = array<i64: 1, 512>}, {pipeline_mode = #tpu.pipeline_mode<synchronous>, transform_indices = @transform_5, window_bounds = array<i64: 512, 128>}, {pipeline_mode = #tpu.pipeline_mode<synchronous>, transform_indices = @transform_6, window_bounds = array<i64: 1, 128>}, {pipeline_mode = #tpu.pipeline_mode<synchronous>, transform_indices = @transform_7, window_bounds = array<i64: 128, 64>}, {pipeline_mode = #tpu.pipeline_mode<synchronous>, transform_indices = @transform_8, window_bounds = array<i64: 1, 64>}, {pipeline_mode = #tpu.pipeline_mode<synchronous>, transform_indices = @transform_9, window_bounds = array<i64: 1, 64>}, {pipeline_mode = #tpu.pipeline_mode<synchronous>, transform_indices = @transform_10, window_bounds = array<i64: 1, 1>}, {transform_indices = @transform_11, window_bounds = array<i64: 1, 1, 8>}]} {
    %c0 = arith.constant 0 : index
    %c0_0 = arith.constant 0 : index
    %0 = vector.load %arg1[%c0, %c0_0] : memref<8x32xf32, #tpu.memory_space<vmem>>, vector<8x32xf32>
    %1 = arith.truncf %0 : vector<8x32xf32> to vector<8x32xbf16>
    %c0_1 = arith.constant 0 : index
    %c0_2 = arith.constant 0 : index
    %2 = vector.load %arg2[%c0_1, %c0_2] : memref<32x512xbf16, #tpu.memory_space<vmem>>, vector<32x512xbf16>
    %cst = arith.constant dense<0.000000e+00> : vector<8x512xf32>
    %3 = tpu.matmul %1, %2, %cst {dimension_numbers = #tpu.dot_dimension_numbers<[1], [0], [0], [1], [0, 0, 1, 1], [], []>} : vector<8x32xbf16>, vector<32x512xbf16>, vector<8x512xf32> -> vector<8x512xf32>
    %c0_3 = arith.constant 0 : index
    %c0_4 = arith.constant 0 : index
    %4 = vector.load %arg3[%c0_3, %c0_4] : memref<1x512xf32, #tpu.memory_space<vmem>>, vector<1x512xf32>
    %5 = vector.broadcast %4 : vector<1x512xf32> to vector<8x512xf32>
    %6 = arith.addf %3, %5 : vector<8x512xf32>
    %cst_5 = arith.constant 0.000000e+00 : f32
    %7 = vector.broadcast %cst_5 : f32 to vector<8x512xf32>
    %8 = arith.maximumf %6, %7 : vector<8x512xf32>
    %9 = arith.truncf %8 : vector<8x512xf32> to vector<8x512xbf16>
    %c0_6 = arith.constant 0 : index
    %c0_7 = arith.constant 0 : index
    %10 = vector.load %arg4[%c0_6, %c0_7] : memref<512x512xbf16, #tpu.memory_space<vmem>>, vector<512x512xbf16>
    %cst_8 = arith.constant dense<0.000000e+00> : vector<8x512xf32>
    %11 = tpu.matmul %9, %10, %cst_8 {dimension_numbers = #tpu.dot_dimension_numbers<[1], [0], [0], [1], [0, 0, 1, 1], [], []>} : vector<8x512xbf16>, vector<512x512xbf16>, vector<8x512xf32> -> vector<8x512xf32>
    %c0_9 = arith.constant 0 : index
    %c0_10 = arith.constant 0 : index
    %12 = vector.load %arg5[%c0_9, %c0_10] : memref<1x512xf32, #tpu.memory_space<vmem>>, vector<1x512xf32>
    %13 = vector.broadcast %12 : vector<1x512xf32> to vector<8x512xf32>
    %14 = arith.addf %11, %13 : vector<8x512xf32>
    %cst_11 = arith.constant 0.000000e+00 : f32
    %15 = vector.broadcast %cst_11 : f32 to vector<8x512xf32>
    %16 = arith.maximumf %14, %15 : vector<8x512xf32>
    %17 = arith.truncf %16 : vector<8x512xf32> to vector<8x512xbf16>
    %c0_12 = arith.constant 0 : index
    %c0_13 = arith.constant 0 : index
    %18 = vector.load %arg6[%c0_12, %c0_13] : memref<512x128xbf16, #tpu.memory_space<vmem>>, vector<512x128xbf16>
    %cst_14 = arith.constant dense<0.000000e+00> : vector<8x128xf32>
    %19 = tpu.matmul %17, %18, %cst_14 {dimension_numbers = #tpu.dot_dimension_numbers<[1], [0], [0], [1], [0, 0, 1, 1], [], []>} : vector<8x512xbf16>, vector<512x128xbf16>, vector<8x128xf32> -> vector<8x128xf32>
    %c0_15 = arith.constant 0 : index
    %c0_16 = arith.constant 0 : index
    %20 = vector.load %arg7[%c0_15, %c0_16] : memref<1x128xf32, #tpu.memory_space<vmem>>, vector<1x128xf32>
    %21 = vector.broadcast %20 : vector<1x128xf32> to vector<8x128xf32>
    %22 = arith.addf %19, %21 : vector<8x128xf32>
    %cst_17 = arith.constant 0.000000e+00 : f32
    %23 = vector.broadcast %cst_17 : f32 to vector<8x128xf32>
    %24 = arith.maximumf %22, %23 : vector<8x128xf32>
    %25 = arith.truncf %24 : vector<8x128xf32> to vector<8x128xbf16>
    %c0_18 = arith.constant 0 : index
    %c0_19 = arith.constant 0 : index
    %26 = vector.load %arg8[%c0_18, %c0_19] : memref<128x64xbf16, #tpu.memory_space<vmem>>, vector<128x64xbf16>
    %cst_20 = arith.constant dense<0.000000e+00> : vector<8x64xf32>
    %27 = tpu.matmul %25, %26, %cst_20 {dimension_numbers = #tpu.dot_dimension_numbers<[1], [0], [0], [1], [0, 0, 1, 1], [], []>} : vector<8x128xbf16>, vector<128x64xbf16>, vector<8x64xf32> -> vector<8x64xf32>
    %c0_21 = arith.constant 0 : index
    %c0_22 = arith.constant 0 : index
    %28 = vector.load %arg9[%c0_21, %c0_22] : memref<1x64xf32, #tpu.memory_space<vmem>>, vector<1x64xf32>
    %29 = vector.broadcast %28 : vector<1x64xf32> to vector<8x64xf32>
    %30 = arith.addf %27, %29 : vector<8x64xf32>
    %cst_23 = arith.constant 0.000000e+00 : f32
    %31 = vector.broadcast %cst_23 : f32 to vector<8x64xf32>
    %32 = arith.maximumf %30, %31 : vector<8x64xf32>
    %c0_24 = arith.constant 0 : index
    %c0_25 = arith.constant 0 : index
    %33 = vector.load %arg10[%c0_24, %c0_25] : memref<1x64xbf16, #tpu.memory_space<vmem>>, vector<1x64xbf16>
    %34 = arith.truncf %32 : vector<8x64xf32> to vector<8x64xbf16>
    %cst_26 = arith.constant dense<0.000000e+00> : vector<1x8xf32>
    %35 = tpu.matmul %33, %34, %cst_26 {dimension_numbers = #tpu.dot_dimension_numbers<[1], [1], [0], [0], [0, 0, 1, 0], [], []>} : vector<1x64xbf16>, vector<8x64xbf16>, vector<1x8xf32> -> vector<1x8xf32>
    %c0_27 = arith.constant 0 : index
    %c0_28 = arith.constant 0 : index
    %36 = vector.load %arg11[%c0_27, %c0_28] : memref<1x1xf32, #tpu.memory_space<vmem>>, vector<1x1xf32>
    %37 = vector.broadcast %36 : vector<1x1xf32> to vector<1x8xf32>
    %38 = arith.addf %35, %37 : vector<1x8xf32>
    %39 = vector.shape_cast %38 : vector<1x8xf32> to vector<1x1x8xf32>
    %c0_29 = arith.constant 0 : index
    %c0_30 = arith.constant 0 : index
    %c0_31 = arith.constant 0 : index
    %40 = vector.load %arg12[%c0_29, %c0_30, %c0_31] : memref<1x1x8xf32, #tpu.memory_space<vmem>>, vector<1x1x8xf32>
    tpu.vector_store %arg12[%c0_29, %c0_30, %c0_31], %39 {strides = array<i32>} : memref<1x1x8xf32, #tpu.memory_space<vmem>>, vector<1x1x8xf32>,
    return
  }
  func.func @transform_0(%arg0: i32) -> (i32, i32) {
    %c0_i32 = arith.constant 0 : i32
    %c0_i32_0 = arith.constant 0 : i32
    return %arg0, %c0_i32 : i32, i32
  }
  func.func @transform_1(%arg0: i32) -> (i32, i32) {
    %c0_i32 = arith.constant 0 : i32
    %c0_i32_0 = arith.constant 0 : i32
    %c0_i32_1 = arith.constant 0 : i32
    return %c0_i32, %c0_i32_0 : i32, i32
  }
  func.func @transform_2(%arg0: i32) -> (i32, i32) {
    %c0_i32 = arith.constant 0 : i32
    %c0_i32_0 = arith.constant 0 : i32
    %c0_i32_1 = arith.constant 0 : i32
    return %c0_i32, %c0_i32_0 : i32, i32
  }
  func.func @transform_3(%arg0: i32) -> (i32, i32) {
    %c0_i32 = arith.constant 0 : i32
    %c0_i32_0 = arith.constant 0 : i32
    %c0_i32_1 = arith.constant 0 : i32
    return %c0_i32, %c0_i32_0 : i32, i32
  }
  func.func @transform_4(%arg0: i32) -> (i32, i32) {
    %c0_i32 = arith.constant 0 : i32
    %c0_i32_0 = arith.constant 0 : i32
    %c0_i32_1 = arith.constant 0 : i32
    return %c0_i32, %c0_i32_0 : i32, i32
  }
  func.func @transform_5(%arg0: i32) -> (i32, i32) {
    %c0_i32 = arith.constant 0 : i32
    %c0_i32_0 = arith.constant 0 : i32
    %c0_i32_1 = arith.constant 0 : i32
    return %c0_i32, %c0_i32_0 : i32, i32
  }
  func.func @transform_6(%arg0: i32) -> (i32, i32) {
    %c0_i32 = arith.constant 0 : i32
    %c0_i32_0 = arith.constant 0 : i32
    %c0_i32_1 = arith.constant 0 : i32
    return %c0_i32, %c0_i32_0 : i32, i32
  }
  func.func @transform_7(%arg0: i32) -> (i32, i32) {
    %c0_i32 = arith.constant 0 : i32
    %c0_i32_0 = arith.constant 0 : i32
    %c0_i32_1 = arith.constant 0 : i32
    return %c0_i32, %c0_i32_0 : i32, i32
  }
  func.func @transform_8(%arg0: i32) -> (i32, i32) {
    %c0_i32 = arith.constant 0 : i32
    %c0_i32_0 = arith.constant 0 : i32
    %c0_i32_1 = arith.constant 0 : i32
    return %c0_i32, %c0_i32_0 : i32, i32
  }
  func.func @transform_9(%arg0: i32) -> (i32, i32) {
    %c0_i32 = arith.constant 0 : i32
    %c0_i32_0 = arith.constant 0 : i32
    %c0_i32_1 = arith.constant 0 : i32
    return %c0_i32, %c0_i32_0 : i32, i32
  }
  func.func @transform_10(%arg0: i32) -> (i32, i32) {
    %c0_i32 = arith.constant 0 : i32
    %c0_i32_0 = arith.constant 0 : i32
    %c0_i32_1 = arith.constant 0 : i32
    return %c0_i32, %c0_i32_0 : i32, i32
  }
  func.func @transform_11(%arg0: i32) -> (i32, i32, i32) {
    %c0_i32 = arith.constant 0 : i32
    %c0_i32_0 = arith.constant 0 : i32
    %c0_i32_1 = arith.constant 0 : i32
    return %arg0, %c0_i32, %c0_i32_0 : i32, i32, i32
  }
}

</mosaic_0001>

<llo_original>
// kernel: tpu_custom_call.1
$region0: #{tpu_custom_call.1}
  #allocation0 [shape = 'u32[]', space=smem, size = 0x4, offset = 0x4, fixed_abs, tag = 'smem constant byte address 0x4 - core index']
  #allocation1 [shape = 'u32[144,128]{1,0:T(1,128)}', space=vmem, size = 0x12000, scoped, tag = 'internal scratch']
  #allocation2 [shape = 'f32[1,1]{1,0:T(1,128)S(1)}', space=vmem, size = 0x200, scoped, tag = 'scoped memory for tpu_custom_call.1']
  %s0 = inlined_call_operand.vmem [shape: f32[8,32], index: 0, kind: input, shape index: {}]
  %s1 = inlined_call_operand.vmem [shape: bf16[32,512], index: 1, kind: input, shape index: {}]
  %s2 = inlined_call_operand.vmem [shape: f32[1,512], index: 2, kind: input, shape index: {}]
  %s3 = inlined_call_operand.hbm [shape: bf16[512,512], index: 3, kind: input, shape index: {}]
  %s4 = inlined_call_operand.vmem [shape: f32[1,512], index: 4, kind: input, shape index: {}]
  %s5 = inlined_call_operand.hbm [shape: bf16[512,128], index: 5, kind: input, shape index: {}]
  %s6 = inlined_call_operand.vmem [shape: f32[1,128], index: 6, kind: input, shape index: {}]
  %s7 = inlined_call_operand.vmem [shape: bf16[128,64], index: 7, kind: input, shape index: {}]
  %s8 = inlined_call_operand.vmem [shape: f32[1,64], index: 8, kind: input, shape index: {}]
  %s9 = inlined_call_operand.vmem [shape: bf16[1,64], index: 9, kind: input, shape index: {}]
  %s10 = inlined_call_operand.<no memory space> [shape: f32[1,1], index: 10, kind: input, shape index: {}]
  %s11 = inlined_call_operand.hbm [shape: f32[1,1,8], index: 11, kind: output, shape index: {}]
  %s12 = sld [smem:[#allocation0]]
  $region62: #{tpu_custom_call.1} parent=0
    _
  %s14 = ssub.s32 1, %s12
  %s15 = scalar_select 0, %s14, %s12
  %v16 = vstv %s10
  %17 = vst [vmem:[#allocation2] sm:$0x1] %v16
  $region1: #{tpu_custom_call.1} parent=0
    #allocation3 [shape = 'u8[524288]{0}', space=vmem, size = 0x80000, scoped, tag = 'input window, operand 3, single buffered']
    #allocation4 [shape = 's32[1]{0}', space=sflag, size = 0x4, scoped, tag = 'scoped memory for tpu_custom_call.1']
    #allocation5 [shape = 's32[1]{0}', space=sflag, size = 0x4, scoped, tag = 'scoped memory for tpu_custom_call.1']
    #allocation6 [shape = 'u8[131072]{0}', space=vmem, size = 0x20000, scoped, tag = 'input window, operand 5, single buffered']
    #allocation7 [shape = 's32[1]{0}', space=sflag, size = 0x4, scoped, tag = 'scoped memory for tpu_custom_call.1']
    #allocation8 [shape = 'u8[512]{0}', space=vmem, size = 0x400, scoped, tag = 'output window, operand 0, single buffered']
    %18 = vsyncpa [#allocation4], 0
    %19 = vsyncpa [#allocation7], 0
    %20 = vsyncpa [#allocation5], 0
    // Predicated region
    $region2: #{tpu_custom_call.1} parent=1 // pred_check
      _
    $region3: #{tpu_custom_call.1} parent=1 // pred_check_branch
      %22 = sbr.rel (0) target = $region5
    $region4: #{tpu_custom_call.1} parent=1 // pred_region
      _
    $region5: #{tpu_custom_call.1} parent=1 // pred_fallthru
      _
    // Predicated region
    $region6: #{tpu_custom_call.1} parent=1 // pred_check
      _
    $region7: #{tpu_custom_call.1} parent=1 // pred_check_branch
      %24 = sbr.rel (0) target = $region9
    $region8: #{tpu_custom_call.1} parent=1 // pred_region
      _
    $region9: #{tpu_custom_call.1} parent=1 // pred_fallthru
      _
    // Predicated region
    $region10: #{tpu_custom_call.1} parent=1 // pred_check
      _
    $region11: #{tpu_custom_call.1} parent=1 // pred_check_branch
      %26 = sbr.rel (0) target = $region13
    $region12: #{tpu_custom_call.1} parent=1 // pred_region
      _
    $region13: #{tpu_custom_call.1} parent=1 // pred_fallthru
      _
    // Predicated region
    $region14: #{tpu_custom_call.1} parent=1 // pred_check
      _
    $region15: #{tpu_custom_call.1} parent=1 // pred_check_branch
      %28 = sbr.rel (0) target = $region17
    $region16: #{tpu_custom_call.1} parent=1 // pred_region
      %s30 = ssub.s32 16384, 16384
      %31 = vsyncadd [#allocation4], %s30
      %s32 = sshll.u32 [#allocation3], 4
      %s33 = int_to_ptr.vmem [resolvable:$true] %s32
      %38 = dma.hbm_to_vmem [thread:$0]  %s3, 16384, %s33, [#allocation4], 256, 256, 16
    $region17: #{tpu_custom_call.1} parent=1 // pred_fallthru
      _
    // Predicated region
    $region18: #{tpu_custom_call.1} parent=1 // pred_check
      _
    $region19: #{tpu_custom_call.1} parent=1 // pred_check_branch
      %40 = sbr.rel (0) target = $region21
    $region20: #{tpu_custom_call.1} parent=1 // pred_region
      _
    $region21: #{tpu_custom_call.1} parent=1 // pred_fallthru
      _
    // Predicated region
    $region22: #{tpu_custom_call.1} parent=1 // pred_check
      _
    $region23: #{tpu_custom_call.1} parent=1 // pred_check_branch
      %42 = sbr.rel (0) target = $region25
    $region24: #{tpu_custom_call.1} parent=1 // pred_region
      %s44 = ssub.s32 4096, 4096
      %45 = vsyncadd [#allocation7], %s44
      %s46 = sshll.u32 [#allocation6], 4
      %s47 = int_to_ptr.vmem [resolvable:$true] %s46
      %52 = dma.hbm_to_vmem [thread:$0]  %s5, 4096, %s47, [#allocation7], 64, 64, 4
    $region25: #{tpu_custom_call.1} parent=1 // pred_fallthru
      _
    // Predicated region
    $region26: #{tpu_custom_call.1} parent=1 // pred_check
      _
    $region27: #{tpu_custom_call.1} parent=1 // pred_check_branch
      %54 = sbr.rel (0) target = $region29
    $region28: #{tpu_custom_call.1} parent=1 // pred_region
      _
    $region29: #{tpu_custom_call.1} parent=1 // pred_fallthru
      _
    // Predicated region
    $region30: #{tpu_custom_call.1} parent=1 // pred_check
      _
    $region31: #{tpu_custom_call.1} parent=1 // pred_check_branch
      %56 = sbr.rel (0) target = $region33
    $region32: #{tpu_custom_call.1} parent=1 // pred_region
      _
    $region33: #{tpu_custom_call.1} parent=1 // pred_fallthru
      _
    // Predicated region
    $region34: #{tpu_custom_call.1} parent=1 // pred_check
      _
    $region35: #{tpu_custom_call.1} parent=1 // pred_check_branch
      %58 = sbr.rel (0) target = $region37
    $region36: #{tpu_custom_call.1} parent=1 // pred_region
      _
    $region37: #{tpu_custom_call.1} parent=1 // pred_fallthru
      _
    // Predicated region
    $region38: #{tpu_custom_call.1} parent=1 // pred_check
      _
    $region39: #{tpu_custom_call.1} parent=1 // pred_check_branch
      %60 = sbr.rel (0) target = $region41
    $region40: #{tpu_custom_call.1} parent=1 // pred_region
      _
    $region41: #{tpu_custom_call.1} parent=1 // pred_fallthru
      _
    // Predicated region
    $region42: #{tpu_custom_call.1} parent=1 // pred_check
      _
    $region43: #{tpu_custom_call.1} parent=1 // pred_check_branch
      %62 = sbr.rel (0) target = $region45
    $region44: #{tpu_custom_call.1} parent=1 // pred_region
      _
    $region45: #{tpu_custom_call.1} parent=1 // pred_fallthru
      _
    // Predicated region
    $region46: #{tpu_custom_call.1} parent=1 // pred_check
      _
    $region47: #{tpu_custom_call.1} parent=1 // pred_check_branch
      %64 = sbr.rel (0) target = $region49
    $region48: #{tpu_custom_call.1} parent=1 // pred_region
      %65 = dma.done [#allocation4], 16384
    $region49: #{tpu_custom_call.1} parent=1 // pred_fallthru
      _
    // Predicated region
    $region50: #{tpu_custom_call.1} parent=1 // pred_check
      _
    $region51: #{tpu_custom_call.1} parent=1 // pred_check_branch
      %67 = sbr.rel (0) target = $region53
    $region52: #{tpu_custom_call.1} parent=1 // pred_region
      %68 = dma.done [#allocation7], 4096
    $region53: #{tpu_custom_call.1} parent=1 // pred_fallthru
      _
    %v70 = vld [vmem:[%s0] sm:$0xff]
    %v71 = vpack.c.bf16 %v70, %v70
    %v72 = vld [vmem:[%s1] sm:$0xff]
    %v73 = vld [vmem:[%s1 + $0x8] sm:$0xff]
    %v74 = vld [vmem:[%s1 + $0x10] sm:$0xff]
    %v75 = vld [vmem:[%s1 + $0x18] sm:$0xff]
    %v76 = vld [vmem:[%s1 + $0x20] sm:$0xff]
    %v77 = vld [vmem:[%s1 + $0x28] sm:$0xff]
    %v78 = vld [vmem:[%s1 + $0x30] sm:$0xff]
    %v79 = vld [vmem:[%s1 + $0x38] sm:$0xff]
    %v80 = vld [vmem:[%s2] sm:$0xf]
    %v82 = vlaneseq
    %v83 = vshrl.u32 %v82, 7
    %v84 = vsub.s32 0, %v83
    %v85 = vrot.slane %v80, %v84
    %v86 = vlaneseq
    %v87 = vshrl.u32 %v86, 7
    %v88 = vsub.s32 1, %v87
    %v89 = vrot.slane %v80, %v88
    %v90 = vlaneseq
    %v91 = vshrl.u32 %v90, 7
    %v92 = vsub.s32 2, %v91
    %v93 = vrot.slane %v80, %v92
    %v94 = vlaneseq
    %v95 = vshrl.u32 %v94, 7
    %v96 = vsub.s32 3, %v95
    %v97 = vrot.slane %v80, %v96
    %v110 = vunpack.c.l.b16 %v72
    %v111 = vunpack.c.h.b16 %v72
    %v112 = vunpack.c.l.b16 %v73
    %v113 = vunpack.c.h.b16 %v73
    %v114 = vunpack.c.l.b16 %v74
    %v115 = vunpack.c.h.b16 %v74
    %v116 = vunpack.c.l.b16 %v75
    %v117 = vunpack.c.h.b16 %v75
    %v118 = vunpack.c.l.b16 %v76
    %v119 = vunpack.c.h.b16 %v76
    %v120 = vunpack.c.l.b16 %v77
    %v121 = vunpack.c.h.b16 %v77
    %v122 = vunpack.c.l.b16 %v78
    %v123 = vunpack.c.h.b16 %v78
    %v124 = vunpack.c.l.b16 %v79
    %v125 = vunpack.c.h.b16 %v79
    %v126 = vpack.c.b16 %v114, %v110
    %v127 = vpack.c.b16 %v115, %v111
    %v128 = vpack.c.b16 %v116, %v112
    %v129 = vpack.c.b16 %v117, %v113
    %v130 = vpack.c.b16 %v122, %v118
    %v131 = vpack.c.b16 %v123, %v119
    %v132 = vpack.c.b16 %v124, %v120
    %v133 = vpack.c.b16 %v125, %v121
    %vm142 = vcmask 261120
    %v144 = vsel %vm142, %v71, 0
    %146 = vmatprep.subr.bf16.mxu0 %v127
    %147 = vmatpush1.bf16.msra.mxu0 %v126
    %148 = vmatprep.subr.bf16.mxu0 %v131
    %149 = vmatpush1.bf16.msra.mxu0 %v130
    %150 = vmatprep.subr.bf16.mxu0 0
    %151 = vmatpush1.bf16.msra.mxu0 0
    %152 = vmatprep.subr.bf16.mxu0 0
    %153 = vmatpush1.bf16.msra.mxu0 0
    %154 = vmatprep.subr.bf16.mxu0 0
    %155 = vmatpush1.bf16.msra.mxu0 0
    %156 = vmatprep.subr.bf16.mxu0 0
    %157 = vmatpush1.bf16.msra.mxu0 0
    %158 = vmatprep.subr.bf16.mxu0 0
    %159 = vmatpush1.bf16.msra.mxu0 0
    %160 = vmatprep.subr.bf16.mxu0 0
    %161 = vmatpush1.bf16.msra.mxu0 0
    %162 = vmatprep.subr.bf16.mxu0 0
    %163 = vmatpush1.bf16.msra.mxu0 0
    %164 = vmatprep.subr.bf16.mxu0 0
    %165 = vmatpush1.bf16.msra.mxu0 0
    %166 = vmatprep.subr.bf16.mxu0 0
    %167 = vmatpush1.bf16.msra.mxu0 0
    %168 = vmatprep.subr.bf16.mxu0 0
    %169 = vmatpush1.bf16.msra.mxu0 0
    %170 = vmatprep.subr.bf16.mxu0 0
    %171 = vmatpush1.bf16.msra.mxu0 0
    %172 = vmatprep.subr.bf16.mxu0 0
    %173 = vmatpush1.bf16.msra.mxu0 0
    %174 = vmatprep.subr.bf16.mxu0 0
    %175 = vmatpush1.bf16.msra.mxu0 0
    %176 = vmatprep.subr.bf16.mxu0 0
    %177 = vmatpush1.bf16.msra.mxu0 0
    %178 = vmatprep.mubr.bf16.mxu0 0
    %179 = vmatmul.mubr.bf16.gmra.mrb[0].mxu0 %v144
    %v180 = vpop.f32.mrb[0].mxu0
    %v181 = vadd.f32 %v85, %v180
    %v182 = vpop.f32.mrb[0].mxu0
    %v183 = vadd.f32 %v89, %v182
    %v184 = vpop.f32.mrb[0].mxu0
    %v185 = vpop.f32.mrb[0].mxu0
    %186 = vdwg.mxu0
    %187 = vmatprep.subr.bf16.mxu0 %v129
    %188 = vmatpush1.bf16.msra.mxu0 %v128
    %189 = vmatprep.subr.bf16.mxu0 %v133
    %190 = vmatpush1.bf16.msra.mxu0 %v132
    %191 = vmatprep.subr.bf16.mxu0 0
    %192 = vmatpush1.bf16.msra.mxu0 0
    %193 = vmatprep.subr.bf16.mxu0 0
    %194 = vmatpush1.bf16.msra.mxu0 0
    %195 = vmatprep.subr.bf16.mxu0 0
    %196 = vmatpush1.bf16.msra.mxu0 0
    %197 = vmatprep.subr.bf16.mxu0 0
    %198 = vmatpush1.bf16.msra.mxu0 0
    %199 = vmatprep.subr.bf16.mxu0 0
    %200 = vmatpush1.bf16.msra.mxu0 0
    %201 = vmatprep.subr.bf16.mxu0 0
    %202 = vmatpush1.bf16.msra.mxu0 0
    %203 = vmatprep.subr.bf16.mxu0 0
    %204 = vmatpush1.bf16.msra.mxu0 0
    %205 = vmatprep.subr.bf16.mxu0 0
    %206 = vmatpush1.bf16.msra.mxu0 0
    %207 = vmatprep.subr.bf16.mxu0 0
    %208 = vmatpush1.bf16.msra.mxu0 0
    %209 = vmatprep.subr.bf16.mxu0 0
    %210 = vmatpush1.bf16.msra.mxu0 0
    %211 = vmatprep.subr.bf16.mxu0 0
    %212 = vmatpush1.bf16.msra.mxu0 0
    %213 = vmatprep.subr.bf16.mxu0 0
    %214 = vmatpush1.bf16.msra.mxu0 0
    %215 = vmatprep.subr.bf16.mxu0 0
    %216 = vmatpush1.bf16.msra.mxu0 0
    %217 = vmatprep.subr.bf16.mxu0 0
    %218 = vmatpush1.bf16.msra.mxu0 0
    %219 = vmatprep.mubr.bf16.mxu0 0
    %220 = vmatmul.mubr.bf16.gmra.mrb[0].mxu0 %v144
    %v221 = vpop.f32.mrb[0].mxu0
    %v222 = vadd.f32 %v93, %v221
    %v223 = vpop.f32.mrb[0].mxu0
    %v224 = vadd.f32 %v97, %v223
    %v225 = vpop.f32.mrb[0].mxu0
    %v226 = vpop.f32.mrb[0].mxu0
    %227 = vdwg.mxu0
    %v228 = vmax.f32 %v181, 0.0
    %v229 = vmax.f32 %v183, 0.0
    %v230 = vmax.f32 %v222, 0.0
    %v231 = vmax.f32 %v224, 0.0
    %v232 = vpack.c.bf16 %v228, %v228
    %v233 = vpack.c.bf16 %v229, %v229
    %v234 = vpack.c.bf16 %v230, %v230
    %v235 = vpack.c.bf16 %v231, %v231
    %v236 = vld [vmem:[#allocation3] sm:$0xff]
    %v237 = vld [vmem:[#allocation3 + $0x8] sm:$0xff]
    %v238 = vld [vmem:[#allocation3 + $0x10] sm:$0xff]
    %v239 = vld [vmem:[#allocation3 + $0x18] sm:$0xff]
    %v240 = vld [vmem:[#allocation3 + $0x20] sm:$0xff]
    %v241 = vld [vmem:[#allocation3 + $0x28] sm:$0xff]
    %v242 = vld [vmem:[#allocation3 + $0x30] sm:$0xff]
    %v243 = vld [vmem:[#allocation3 + $0x38] sm:$0xff]
    %v244 = vld [vmem:[#allocation3 + $0x40] sm:$0xff]
    %v245 = vld [vmem:[#allocation3 + $0x48] sm:$0xff]
    %v246 = vld [vmem:[#allocation3 + $0x50] sm:$0xff]
    %v247 = vld [vmem:[#allocation3 + $0x58] sm:$0xff]
    %v248 = vld [vmem:[#allocation3 + $0x60] sm:$0xff]
    %v249 = vld [vmem:[#allocation3 + $0x68] sm:$0xff]
    %v250 = vld [vmem:[#allocation3 + $0x70] sm:$0xff]
    %v251 = vld [vmem:[#allocation3 + $0x78] sm:$0xff]
    %v252 = vld [vmem:[#allocation3 + $0x80] sm:$0xff]
    %v253 = vld [vmem:[#allocation3 + $0x88] sm:$0xff]
    %v254 = vld [vmem:[#allocation3 + $0x90] sm:$0xff]
    %v255 = vld [vmem:[#allocation3 + $0x98] sm:$0xff]
    %v256 = vld [vmem:[#allocation3 + $0xa0] sm:$0xff]
    %v257 = vld [vmem:[#allocation3 + $0xa8] sm:$0xff]
    %v258 = vld [vmem:[#allocation3 + $0xb0] sm:$0xff]
    %v259 = vld [vmem:[#allocation3 + $0xb8] sm:$0xff]
    %v260 = vld [vmem:[#allocation3 + $0xc0] sm:$0xff]
    %v261 = vld [vmem:[#allocation3 + $0xc8] sm:$0xff]
    %v262 = vld [vmem:[#allocation3 + $0xd0] sm:$0xff]
    %v263 = vld [vmem:[#allocation3 + $0xd8] sm:$0xff]
    %v264 = vld [vmem:[#allocation3 + $0xe0] sm:$0xff]
    %v265 = vld [vmem:[#allocation3 + $0xe8] sm:$0xff]
    %v266 = vld [vmem:[#allocation3 + $0xf0] sm:$0xff]
    %v267 = vld [vmem:[#allocation3 + $0xf8] sm:$0xff]
    %v268 = vld [vmem:[#allocation3 + $0x100] sm:$0xff]
    %v269 = vld [vmem:[#allocation3 + $0x108] sm:$0xff]
    %v270 = vld [vmem:[#allocation3 + $0x110] sm:$0xff]
    %v271 = vld [vmem:[#allocation3 + $0x118] sm:$0xff]
    %v272 = vld [vmem:[#allocation3 + $0x120] sm:$0xff]
    %v273 = vld [vmem:[#allocation3 + $0x128] sm:$0xff]
    %v274 = vld [vmem:[#allocation3 + $0x130] sm:$0xff]
    %v275 = vld [vmem:[#allocation3 + $0x138] sm:$0xff]
    %v276 = vld [vmem:[#allocation3 + $0x140] sm:$0xff]
    %v277 = vld [vmem:[#allocation3 + $0x148] sm:$0xff]
    %v278 = vld [vmem:[#allocation3 + $0x150] sm:$0xff]
    %v279 = vld [vmem:[#allocation3 + $0x158] sm:$0xff]
    %v280 = vld [vmem:[#allocation3 + $0x160] sm:$0xff]
    %v281 = vld [vmem:[#allocation3 + $0x168] sm:$0xff]
    %v282 = vld [vmem:[#allocation3 + $0x170] sm:$0xff]
    %v283 = vld [vmem:[#allocation3 + $0x178] sm:$0xff]
    %v284 = vld [vmem:[#allocation3 + $0x180] sm:$0xff]
    %v285 = vld [vmem:[#allocation3 + $0x188] sm:$0xff]
    %v286 = vld [vmem:[#allocation3 + $0x190] sm:$0xff]
    %v287 = vld [vmem:[#allocation3 + $0x198] sm:$0xff]
    %v288 = vld [vmem:[#allocation3 + $0x1a0] sm:$0xff]
    %v289 = vld [vmem:[#allocation3 + $0x1a8] sm:$0xff]
    %v290 = vld [vmem:[#allocation3 + $0x1b0] sm:$0xff]
    %v291 = vld [vmem:[#allocation3 + $0x1b8] sm:$0xff]
    %v292 = vld [vmem:[#allocation3 + $0x1c0] sm:$0xff]
    %v293 = vld [vmem:[#allocation3 + $0x1c8] sm:$0xff]
    %v294 = vld [vmem:[#allocation3 + $0x1d0] sm:$0xff]
    %v295 = vld [vmem:[#allocation3 + $0x1d8] sm:$0xff]
    %v296 = vld [vmem:[#allocation3 + $0x1e0] sm:$0xff]
    %v297 = vld [vmem:[#allocation3 + $0x1e8] sm:$0xff]
    %v298 = vld [vmem:[#allocation3 + $0x1f0] sm:$0xff]
    %v299 = vld [vmem:[#allocation3 + $0x1f8] sm:$0xff]
    %v300 = vld [vmem:[#allocation3 + $0x200] sm:$0xff]
    %v301 = vld [vmem:[#allocation3 + $0x208] sm:$0xff]
    %v302 = vld [vmem:[#allocation3 + $0x210] sm:$0xff]
    %v303 = vld [vmem:[#allocation3 + $0x218] sm:$0xff]
    %v304 = vld [vmem:[#allocation3 + $0x220] sm:$0xff]
    %v305 = vld [vmem:[#allocation3 + $0x228] sm:$0xff]
    %v306 = vld [vmem:[#allocation3 + $0x230] sm:$0xff]
    %v307 = vld [vmem:[#allocation3 + $0x238] sm:$0xff]
    %v308 = vld [vmem:[#allocation3 + $0x240] sm:$0xff]
    %v309 = vld [vmem:[#allocation3 + $0x248] sm:$0xff]
    %v310 = vld [vmem:[#allocation3 + $0x250] sm:$0xff]
    %v311 = vld [vmem:[#allocation3 + $0x258] sm:$0xff]
    %v312 = vld [vmem:[#allocation3 + $0x260] sm:$0xff]
    %v313 = vld [vmem:[#allocation3 + $0x268] sm:$0xff]
    %v314 = vld [vmem:[#allocation3 + $0x270] sm:$0xff]
    %v315 = vld [vmem:[#allocation3 + $0x278] sm:$0xff]
    %v316 = vld [vmem:[#allocation3 + $0x280] sm:$0xff]
    %v317 = vld [vmem:[#allocation3 + $0x288] sm:$0xff]
    %v318 = vld [vmem:[#allocation3 + $0x290] sm:$0xff]
    %v319 = vld [vmem:[#allocation3 + $0x298] sm:$0xff]
    %v320 = vld [vmem:[#allocation3 + $0x2a0] sm:$0xff]
    %v321 = vld [vmem:[#allocation3 + $0x2a8] sm:$0xff]
    %v322 = vld [vmem:[#allocation3 + $0x2b0] sm:$0xff]
    %v323 = vld [vmem:[#allocation3 + $0x2b8] sm:$0xff]
    %v324 = vld [vmem:[#allocation3 + $0x2c0] sm:$0xff]
    %v325 = vld [vmem:[#allocation3 + $0x2c8] sm:$0xff]
    %v326 = vld [vmem:[#allocation3 + $0x2d0] sm:$0xff]
    %v327 = vld [vmem:[#allocation3 + $0x2d8] sm:$0xff]
    %v328 = vld [vmem:[#allocation3 + $0x2e0] sm:$0xff]
    %v329 = vld [vmem:[#allocation3 + $0x2e8] sm:$0xff]
    %v330 = vld [vmem:[#allocation3 + $0x2f0] sm:$0xff]
    %v331 = vld [vmem:[#allocation3 + $0x2f8] sm:$0xff]
    %v332 = vld [vmem:[#allocation3 + $0x300] sm:$0xff]
    %v333 = vld [vmem:[#allocation3 + $0x308] sm:$0xff]
    %v334 = vld [vmem:[#allocation3 + $0x310] sm:$0xff]
    %v335 = vld [vmem:[#allocation3 + $0x318] sm:$0xff]
    %v336 = vld [vmem:[#allocation3 + $0x320] sm:$0xff]
    %v337 = vld [vmem:[#allocation3 + $0x328] sm:$0xff]
    %v338 = vld [vmem:[#allocation3 + $0x330] sm:$0xff]
    %v339 = vld [vmem:[#allocation3 + $0x338] sm:$0xff]
    %v340 = vld [vmem:[#allocation3 + $0x340] sm:$0xff]
    %v341 = vld [vmem:[#allocation3 + $0x348] sm:$0xff]
    %v342 = vld [vmem:[#allocation3 + $0x350] sm:$0xff]
    %v343 = vld [vmem:[#allocation3 + $0x358] sm:$0xff]
    %v344 = vld [vmem:[#allocation3 + $0x360] sm:$0xff]
    %v345 = vld [vmem:[#allocation3 + $0x368] sm:$0xff]
    %v346 = vld [vmem:[#allocation3 + $0x370] sm:$0xff]
    %v347 = vld [vmem:[#allocation3 + $0x378] sm:$0xff]
    %v348 = vld [vmem:[#allocation3 + $0x380] sm:$0xff]
    %v349 = vld [vmem:[#allocation3 + $0x388] sm:$0xff]
    %v350 = vld [vmem:[#allocation3 + $0x390] sm:$0xff]
    %v351 = vld [vmem:[#allocation3 + $0x398] sm:$0xff]
    %v352 = vld [vmem:[#allocation3 + $0x3a0] sm:$0xff]
    %v353 = vld [vmem:[#allocation3 + $0x3a8] sm:$0xff]
    %v354 = vld [vmem:[#allocation3 + $0x3b0] sm:$0xff]
    %v355 = vld [vmem:[#allocation3 + $0x3b8] sm:$0xff]
    %v356 = vld [vmem:[#allocation3 + $0x3c0] sm:$0xff]
    %v357 = vld [vmem:[#allocation3 + $0x3c8] sm:$0xff]
    %v358 = vld [vmem:[#allocation3 + $0x3d0] sm:$0xff]
    %v359 = vld [vmem:[#allocation3 + $0x3d8] sm:$0xff]
    %v360 = vld [vmem:[#allocation3 + $0x3e0] sm:$0xff]
    %v361 = vld [vmem:[#allocation3 + $0x3e8] sm:$0xff]
    %v362 = vld [vmem:[#allocation3 + $0x3f0] sm:$0xff]
    %v363 = vld [vmem:[#allocation3 + $0x3f8] sm:$0xff]
    %v364 = vld [vmem:[%s4] sm:$0xf]
    %v366 = vlaneseq
    %v367 = vshrl.u32 %v366, 7
    %v368 = vsub.s32 0, %v367
    %v369 = vrot.slane %v364, %v368
    %v370 = vlaneseq
    %v371 = vshrl.u32 %v370, 7
    %v372 = vsub.s32 1, %v371
    %v373 = vrot.slane %v364, %v372
    %v374 = vlaneseq
    %v375 = vshrl.u32 %v374, 7
    %v376 = vsub.s32 2, %v375
    %v377 = vrot.slane %v364, %v376
    %v378 = vlaneseq
    %v379 = vshrl.u32 %v378, 7
    %v380 = vsub.s32 3, %v379
    %v381 = vrot.slane %v364, %v380
    %v514 = vunpack.c.l.b16 %v236
    %v515 = vunpack.c.h.b16 %v236
    %v516 = vunpack.c.l.b16 %v237
    %v517 = vunpack.c.h.b16 %v237
    %v518 = vunpack.c.l.b16 %v238
    %v519 = vunpack.c.h.b16 %v238
    %v520 = vunpack.c.l.b16 %v239
    %v521 = vunpack.c.h.b16 %v239
    %v522 = vunpack.c.l.b16 %v240
    %v523 = vunpack.c.h.b16 %v240
    %v524 = vunpack.c.l.b16 %v241
    %v525 = vunpack.c.h.b16 %v241
    %v526 = vunpack.c.l.b16 %v242
    %v527 = vunpack.c.h.b16 %v242
    %v528 = vunpack.c.l.b16 %v243
    %v529 = vunpack.c.h.b16 %v243
    %v530 = vunpack.c.l.b16 %v244
    %v531 = vunpack.c.h.b16 %v244
    %v532 = vunpack.c.l.b16 %v245
    %v533 = vunpack.c.h.b16 %v245
    %v534 = vunpack.c.l.b16 %v246
    %v535 = vunpack.c.h.b16 %v246
    %v536 = vunpack.c.l.b16 %v247
    %v537 = vunpack.c.h.b16 %v247
    %v538 = vunpack.c.l.b16 %v248
    %v539 = vunpack.c.h.b16 %v248
    %v540 = vunpack.c.l.b16 %v249
    %v541 = vunpack.c.h.b16 %v249
    %v542 = vunpack.c.l.b16 %v250
    %v543 = vunpack.c.h.b16 %v250
    %v544 = vunpack.c.l.b16 %v251
    %v545 = vunpack.c.h.b16 %v251
    %v546 = vunpack.c.l.b16 %v252
    %v547 = vunpack.c.h.b16 %v252
    %v548 = vunpack.c.l.b16 %v253
    %v549 = vunpack.c.h.b16 %v253
    %v550 = vunpack.c.l.b16 %v254
    %v551 = vunpack.c.h.b16 %v254
    %v552 = vunpack.c.l.b16 %v255
    %v553 = vunpack.c.h.b16 %v255
    %v554 = vunpack.c.l.b16 %v256
    %v555 = vunpack.c.h.b16 %v256
    %v556 = vunpack.c.l.b16 %v257
    %v557 = vunpack.c.h.b16 %v257
    %v558 = vunpack.c.l.b16 %v258
    %v559 = vunpack.c.h.b16 %v258
    %v560 = vunpack.c.l.b16 %v259
    %v561 = vunpack.c.h.b16 %v259
    %v562 = vunpack.c.l.b16 %v260
    %v563 = vunpack.c.h.b16 %v260
    %v564 = vunpack.c.l.b16 %v261
    %v565 = vunpack.c.h.b16 %v261
    %v566 = vunpack.c.l.b16 %v262
    %v567 = vunpack.c.h.b16 %v262
    %v568 = vunpack.c.l.b16 %v263
    %v569 = vunpack.c.h.b16 %v263
    %v570 = vunpack.c.l.b16 %v264
    %v571 = vunpack.c.h.b16 %v264
    %v572 = vunpack.c.l.b16 %v265
    %v573 = vunpack.c.h.b16 %v265
    %v574 = vunpack.c.l.b16 %v266
    %v575 = vunpack.c.h.b16 %v266
    %v576 = vunpack.c.l.b16 %v267
    %v577 = vunpack.c.h.b16 %v267
    %v578 = vunpack.c.l.b16 %v268
    %v579 = vunpack.c.h.b16 %v268
    %v580 = vunpack.c.l.b16 %v269
    %v581 = vunpack.c.h.b16 %v269
    %v582 = vunpack.c.l.b16 %v270
    %v583 = vunpack.c.h.b16 %v270
    %v584 = vunpack.c.l.b16 %v271
    %v585 = vunpack.c.h.b16 %v271
    %v586 = vunpack.c.l.b16 %v272
    %v587 = vunpack.c.h.b16 %v272
    %v588 = vunpack.c.l.b16 %v273
    %v589 = vunpack.c.h.b16 %v273
    %v590 = vunpack.c.l.b16 %v274
    %v591 = vunpack.c.h.b16 %v274
    %v592 = vunpack.c.l.b16 %v275
    %v593 = vunpack.c.h.b16 %v275
    %v594 = vunpack.c.l.b16 %v276
    %v595 = vunpack.c.h.b16 %v276
    %v596 = vunpack.c.l.b16 %v277
    %v597 = vunpack.c.h.b16 %v277
    %v598 = vunpack.c.l.b16 %v278
    %v599 = vunpack.c.h.b16 %v278
    %v600 = vunpack.c.l.b16 %v279
    %v601 = vunpack.c.h.b16 %v279
    %v602 = vunpack.c.l.b16 %v280
    %v603 = vunpack.c.h.b16 %v280
    %v604 = vunpack.c.l.b16 %v281
    %v605 = vunpack.c.h.b16 %v281
    %v606 = vunpack.c.l.b16 %v282
    %v607 = vunpack.c.h.b16 %v282
    %v608 = vunpack.c.l.b16 %v283
    %v609 = vunpack.c.h.b16 %v283
    %v610 = vunpack.c.l.b16 %v284
    %v611 = vunpack.c.h.b16 %v284
    %v612 = vunpack.c.l.b16 %v285
    %v613 = vunpack.c.h.b16 %v285
    %v614 = vunpack.c.l.b16 %v286
    %v615 = vunpack.c.h.b16 %v286
    %v616 = vunpack.c.l.b16 %v287
    %v617 = vunpack.c.h.b16 %v287
    %v618 = vunpack.c.l.b16 %v288
    %v619 = vunpack.c.h.b16 %v288
    %v620 = vunpack.c.l.b16 %v289
    %v621 = vunpack.c.h.b16 %v289
    %v622 = vunpack.c.l.b16 %v290
    %v623 = vunpack.c.h.b16 %v290
    %v624 = vunpack.c.l.b16 %v291
    %v625 = vunpack.c.h.b16 %v291
    %v626 = vunpack.c.l.b16 %v292
    %v627 = vunpack.c.h.b16 %v292
    %v628 = vunpack.c.l.b16 %v293
    %v629 = vunpack.c.h.b16 %v293
    %v630 = vunpack.c.l.b16 %v294
    %v631 = vunpack.c.h.b16 %v294
    %v632 = vunpack.c.l.b16 %v295
    %v633 = vunpack.c.h.b16 %v295
    %v634 = vunpack.c.l.b16 %v296
    %v635 = vunpack.c.h.b16 %v296
    %v636 = vunpack.c.l.b16 %v297
    %v637 = vunpack.c.h.b16 %v297
    %v638 = vunpack.c.l.b16 %v298
    %v639 = vunpack.c.h.b16 %v298
    %v640 = vunpack.c.l.b16 %v299
    %v641 = vunpack.c.h.b16 %v299
    %v642 = vunpack.c.l.b16 %v300
    %v643 = vunpack.c.h.b16 %v300
    %v644 = vunpack.c.l.b16 %v301
    %v645 = vunpack.c.h.b16 %v301
    %v646 = vunpack.c.l.b16 %v302
    %v647 = vunpack.c.h.b16 %v302
    %v648 = vunpack.c.l.b16 %v303
    %v649 = vunpack.c.h.b16 %v303
    %v650 = vunpack.c.l.b16 %v304
    %v651 = vunpack.c.h.b16 %v304
    %v652 = vunpack.c.l.b16 %v305
    %v653 = vunpack.c.h.b16 %v305
    %v654 = vunpack.c.l.b16 %v306
    %v655 = vunpack.c.h.b16 %v306
    %v656 = vunpack.c.l.b16 %v307
    %v657 = vunpack.c.h.b16 %v307
    %v658 = vunpack.c.l.b16 %v308
    %v659 = vunpack.c.h.b16 %v308
    %v660 = vunpack.c.l.b16 %v309
    %v661 = vunpack.c.h.b16 %v309
    %v662 = vunpack.c.l.b16 %v310
    %v663 = vunpack.c.h.b16 %v310
    %v664 = vunpack.c.l.b16 %v311
    %v665 = vunpack.c.h.b16 %v311
    %v666 = vunpack.c.l.b16 %v312
    %v667 = vunpack.c.h.b16 %v312
    %v668 = vunpack.c.l.b16 %v313
    %v669 = vunpack.c.h.b16 %v313
    %v670 = vunpack.c.l.b16 %v314
    %v671 = vunpack.c.h.b16 %v314
    %v672 = vunpack.c.l.b16 %v315
    %v673 = vunpack.c.h.b16 %v315
    %v674 = vunpack.c.l.b16 %v316
    %v675 = vunpack.c.h.b16 %v316
    %v676 = vunpack.c.l.b16 %v317
    %v677 = vunpack.c.h.b16 %v317
    %v678 = vunpack.c.l.b16 %v318
    %v679 = vunpack.c.h.b16 %v318
    %v680 = vunpack.c.l.b16 %v319
    %v681 = vunpack.c.h.b16 %v319
    %v682 = vunpack.c.l.b16 %v320
    %v683 = vunpack.c.h.b16 %v320
    %v684 = vunpack.c.l.b16 %v321
    %v685 = vunpack.c.h.b16 %v321
    %v686 = vunpack.c.l.b16 %v322
    %v687 = vunpack.c.h.b16 %v322
    %v688 = vunpack.c.l.b16 %v323
    %v689 = vunpack.c.h.b16 %v323
    %v690 = vunpack.c.l.b16 %v324
    %v691 = vunpack.c.h.b16 %v324
    %v692 = vunpack.c.l.b16 %v325
    %v693 = vunpack.c.h.b16 %v325
    %v694 = vunpack.c.l.b16 %v326
    %v695 = vunpack.c.h.b16 %v326
    %v696 = vunpack.c.l.b16 %v327
    %v697 = vunpack.c.h.b16 %v327
    %v698 = vunpack.c.l.b16 %v328
    %v699 = vunpack.c.h.b16 %v328
    %v700 = vunpack.c.l.b16 %v329
    %v701 = vunpack.c.h.b16 %v329
    %v702 = vunpack.c.l.b16 %v330
    %v703 = vunpack.c.h.b16 %v330
    %v704 = vunpack.c.l.b16 %v331
    %v705 = vunpack.c.h.b16 %v331
    %v706 = vunpack.c.l.b16 %v332
    %v707 = vunpack.c.h.b16 %v332
    %v708 = vunpack.c.l.b16 %v333
    %v709 = vunpack.c.h.b16 %v333
    %v710 = vunpack.c.l.b16 %v334
    %v711 = vunpack.c.h.b16 %v334
    %v712 = vunpack.c.l.b16 %v335
    %v713 = vunpack.c.h.b16 %v335
    %v714 = vunpack.c.l.b16 %v336
    %v715 = vunpack.c.h.b16 %v336
    %v716 = vunpack.c.l.b16 %v337
    %v717 = vunpack.c.h.b16 %v337
    %v718 = vunpack.c.l.b16 %v338
    %v719 = vunpack.c.h.b16 %v338
    %v720 = vunpack.c.l.b16 %v339
    %v721 = vunpack.c.h.b16 %v339
    %v722 = vunpack.c.l.b16 %v340
    %v723 = vunpack.c.h.b16 %v340
    %v724 = vunpack.c.l.b16 %v341
    %v725 = vunpack.c.h.b16 %v341
    %v726 = vunpack.c.l.b16 %v342
    %v727 = vunpack.c.h.b16 %v342
    %v728 = vunpack.c.l.b16 %v343
    %v729 = vunpack.c.h.b16 %v343
    %v730 = vunpack.c.l.b16 %v344
    %v731 = vunpack.c.h.b16 %v344
    %v732 = vunpack.c.l.b16 %v345
    %v733 = vunpack.c.h.b16 %v345
    %v734 = vunpack.c.l.b16 %v346
    %v735 = vunpack.c.h.b16 %v346
    %v736 = vunpack.c.l.b16 %v347
    %v737 = vunpack.c.h.b16 %v347
    %v738 = vunpack.c.l.b16 %v348
    %v739 = vunpack.c.h.b16 %v348
    %v740 = vunpack.c.l.b16 %v349
    %v741 = vunpack.c.h.b16 %v349
    %v742 = vunpack.c.l.b16 %v350
    %v743 = vunpack.c.h.b16 %v350
    %v744 = vunpack.c.l.b16 %v351
    %v745 = vunpack.c.h.b16 %v351
    %v746 = vunpack.c.l.b16 %v352
    %v747 = vunpack.c.h.b16 %v352
    %v748 = vunpack.c.l.b16 %v353
    %v749 = vunpack.c.h.b16 %v353
    %v750 = vunpack.c.l.b16 %v354
    %v751 = vunpack.c.h.b16 %v354
    %v752 = vunpack.c.l.b16 %v355
    %v753 = vunpack.c.h.b16 %v355
    %v754 = vunpack.c.l.b16 %v356
    %v755 = vunpack.c.h.b16 %v356
    %v756 = vunpack.c.l.b16 %v357
    %v757 = vunpack.c.h.b16 %v357
    %v758 = vunpack.c.l.b16 %v358
    %v759 = vunpack.c.h.b16 %v358
    %v760 = vunpack.c.l.b16 %v359
    %v761 = vunpack.c.h.b16 %v359
    %v762 = vunpack.c.l.b16 %v360
    %v763 = vunpack.c.h.b16 %v360
    %v764 = vunpack.c.l.b16 %v361
    %v765 = vunpack.c.h.b16 %v361
    %v766 = vunpack.c.l.b16 %v362
    %v767 = vunpack.c.h.b16 %v362
    %v768 = vunpack.c.l.b16 %v363
    %v769 = vunpack.c.h.b16 %v363
    %v770 = vpack.c.b16 %v518, %v514
    %v771 = vpack.c.b16 %v519, %v515
    %v772 = vpack.c.b16 %v520, %v516
    %v773 = vpack.c.b16 %v521, %v517
    %v774 = vpack.c.b16 %v526, %v522
    %v775 = vpack.c.b16 %v527, %v523
    %v776 = vpack.c.b16 %v528, %v524
    %v777 = vpack.c.b16 %v529, %v525
    %v778 = vpack.c.b16 %v534, %v530
    %v779 = vpack.c.b16 %v535, %v531
    %v780 = vpack.c.b16 %v536, %v532
    %v781 = vpack.c.b16 %v537, %v533
    %v782 = vpack.c.b16 %v542, %v538
    %v783 = vpack.c.b16 %v543, %v539
    %v784 = vpack.c.b16 %v544, %v540
    %v785 = vpack.c.b16 %v545, %v541
    %v786 = vpack.c.b16 %v550, %v546
    %v787 = vpack.c.b16 %v551, %v547
    %v788 = vpack.c.b16 %v552, %v548
    %v789 = vpack.c.b16 %v553, %v549
    %v790 = vpack.c.b16 %v558, %v554
    %v791 = vpack.c.b16 %v559, %v555
    %v792 = vpack.c.b16 %v560, %v556
    %v793 = vpack.c.b16 %v561, %v557
    %v794 = vpack.c.b16 %v566, %v562
    %v795 = vpack.c.b16 %v567, %v563
    %v796 = vpack.c.b16 %v568, %v564
    %v797 = vpack.c.b16 %v569, %v565
    %v798 = vpack.c.b16 %v574, %v570
    %v799 = vpack.c.b16 %v575, %v571
    %v800 = vpack.c.b16 %v576, %v572
    %v801 = vpack.c.b16 %v577, %v573
    %v802 = vpack.c.b16 %v582, %v578
    %v803 = vpack.c.b16 %v583, %v579
    %v804 = vpack.c.b16 %v584, %v580
    %v805 = vpack.c.b16 %v585, %v581
    %v806 = vpack.c.b16 %v590, %v586
    %v807 = vpack.c.b16 %v591, %v587
    %v808 = vpack.c.b16 %v592, %v588
    %v809 = vpack.c.b16 %v593, %v589
    %v810 = vpack.c.b16 %v598, %v594
    %v811 = vpack.c.b16 %v599, %v595
    %v812 = vpack.c.b16 %v600, %v596
    %v813 = vpack.c.b16 %v601, %v597
    %v814 = vpack.c.b16 %v606, %v602
    %v815 = vpack.c.b16 %v607, %v603
    %v816 = vpack.c.b16 %v608, %v604
    %v817 = vpack.c.b16 %v609, %v605
    %v818 = vpack.c.b16 %v614, %v610
    %v819 = vpack.c.b16 %v615, %v611
    %v820 = vpack.c.b16 %v616, %v612
    %v821 = vpack.c.b16 %v617, %v613
    %v822 = vpack.c.b16 %v622, %v618
    %v823 = vpack.c.b16 %v623, %v619
    %v824 = vpack.c.b16 %v624, %v620
    %v825 = vpack.c.b16 %v625, %v621
    %v826 = vpack.c.b16 %v630, %v626
    %v827 = vpack.c.b16 %v631, %v627
    %v828 = vpack.c.b16 %v632, %v628
    %v829 = vpack.c.b16 %v633, %v629
    %v830 = vpack.c.b16 %v638, %v634
    %v831 = vpack.c.b16 %v639, %v635
    %v832 = vpack.c.b16 %v640, %v636
    %v833 = vpack.c.b16 %v641, %v637
    %v834 = vpack.c.b16 %v646, %v642
    %v835 = vpack.c.b16 %v647, %v643
    %v836 = vpack.c.b16 %v648, %v644
    %v837 = vpack.c.b16 %v649, %v645
    %v838 = vpack.c.b16 %v654, %v650
    %v839 = vpack.c.b16 %v655, %v651
    %v840 = vpack.c.b16 %v656, %v652
    %v841 = vpack.c.b16 %v657, %v653
    %v842 = vpack.c.b16 %v662, %v658
    %v843 = vpack.c.b16 %v663, %v659
    %v844 = vpack.c.b16 %v664, %v660
    %v845 = vpack.c.b16 %v665, %v661
    %v846 = vpack.c.b16 %v670, %v666
    %v847 = vpack.c.b16 %v671, %v667
    %v848 = vpack.c.b16 %v672, %v668
    %v849 = vpack.c.b16 %v673, %v669
    %v850 = vpack.c.b16 %v678, %v674
    %v851 = vpack.c.b16 %v679, %v675
    %v852 = vpack.c.b16 %v680, %v676
    %v853 = vpack.c.b16 %v681, %v677
    %v854 = vpack.c.b16 %v686, %v682
    %v855 = vpack.c.b16 %v687, %v683
    %v856 = vpack.c.b16 %v688, %v684
    %v857 = vpack.c.b16 %v689, %v685
    %v858 = vpack.c.b16 %v694, %v690
    %v859 = vpack.c.b16 %v695, %v691
    %v860 = vpack.c.b16 %v696, %v692
    %v861 = vpack.c.b16 %v697, %v693
    %v862 = vpack.c.b16 %v702, %v698
    %v863 = vpack.c.b16 %v703, %v699
    %v864 = vpack.c.b16 %v704, %v700
    %v865 = vpack.c.b16 %v705, %v701
    %v866 = vpack.c.b16 %v710, %v706
    %v867 = vpack.c.b16 %v711, %v707
    %v868 = vpack.c.b16 %v712, %v708
    %v869 = vpack.c.b16 %v713, %v709
    %v870 = vpack.c.b16 %v718, %v714
    %v871 = vpack.c.b16 %v719, %v715
    %v872 = vpack.c.b16 %v720, %v716
    %v873 = vpack.c.b16 %v721, %v717
    %v874 = vpack.c.b16 %v726, %v722
    %v875 = vpack.c.b16 %v727, %v723
    %v876 = vpack.c.b16 %v728, %v724
    %v877 = vpack.c.b16 %v729, %v725
    %v878 = vpack.c.b16 %v734, %v730
    %v879 = vpack.c.b16 %v735, %v731
    %v880 = vpack.c.b16 %v736, %v732
    %v881 = vpack.c.b16 %v737, %v733
    %v882 = vpack.c.b16 %v742, %v738
    %v883 = vpack.c.b16 %v743, %v739
    %v884 = vpack.c.b16 %v744, %v740
    %v885 = vpack.c.b16 %v745, %v741
    %v886 = vpack.c.b16 %v750, %v746
    %v887 = vpack.c.b16 %v751, %v747
    %v888 = vpack.c.b16 %v752, %v748
    %v889 = vpack.c.b16 %v753, %v749
    %v890 = vpack.c.b16 %v758, %v754
    %v891 = vpack.c.b16 %v759, %v755
    %v892 = vpack.c.b16 %v760, %v756
    %v893 = vpack.c.b16 %v761, %v757
    %v894 = vpack.c.b16 %v766, %v762
    %v895 = vpack.c.b16 %v767, %v763
    %v896 = vpack.c.b16 %v768, %v764
    %v897 = vpack.c.b16 %v769, %v765
    %1026 = vmatprep.subr.bf16.mxu0 %v771
    %1027 = vmatpush1.bf16.msra.mxu0 %v770
    %1028 = vmatprep.subr.bf16.mxu0 %v775
    %1029 = vmatpush1.bf16.msra.mxu0 %v774
    %1030 = vmatprep.subr.bf16.mxu0 %v779
    %1031 = vmatpush1.bf16.msra.mxu0 %v778
    %1032 = vmatprep.subr.bf16.mxu0 %v783
    %1033 = vmatpush1.bf16.msra.mxu0 %v782
    %1034 = vmatprep.subr.bf16.mxu0 %v787
    %1035 = vmatpush1.bf16.msra.mxu0 %v786
    %1036 = vmatprep.subr.bf16.mxu0 %v791
    %1037 = vmatpush1.bf16.msra.mxu0 %v790
    %1038 = vmatprep.subr.bf16.mxu0 %v795
    %1039 = vmatpush1.bf16.msra.mxu0 %v794
    %1040 = vmatprep.subr.bf16.mxu0 %v799
    %1041 = vmatpush1.bf16.msra.mxu0 %v798
    %1042 = vmatprep.subr.bf16.mxu0 %v803
    %1043 = vmatpush1.bf16.msra.mxu0 %v802
    %1044 = vmatprep.subr.bf16.mxu0 %v807
    %1045 = vmatpush1.bf16.msra.mxu0 %v806
    %1046 = vmatprep.subr.bf16.mxu0 %v811
    %1047 = vmatpush1.bf16.msra.mxu0 %v810
    %1048 = vmatprep.subr.bf16.mxu0 %v815
    %1049 = vmatpush1.bf16.msra.mxu0 %v814
    %1050 = vmatprep.subr.bf16.mxu0 %v819
    %1051 = vmatpush1.bf16.msra.mxu0 %v818
    %1052 = vmatprep.subr.bf16.mxu0 %v823
    %1053 = vmatpush1.bf16.msra.mxu0 %v822
    %1054 = vmatprep.subr.bf16.mxu0 %v827
    %1055 = vmatpush1.bf16.msra.mxu0 %v826
    %1056 = vmatprep.subr.bf16.mxu0 %v831
    %1057 = vmatpush1.bf16.msra.mxu0 %v830
    %1058 = vmatprep.mubr.bf16.mxu0 %v233
    %1059 = vmatmul.mubr.bf16.gmra.mrb[0].mxu0 %v232
    %v1060 = vpop.f32.mrb[0].mxu0
    %v1061 = vadd.f32 %v369, %v1060
    %v1062 = vpop.f32.mrb[0].mxu0
    %v1063 = vadd.f32 %v373, %v1062
    %v1064 = vpop.f32.mrb[0].mxu0
    %v1065 = vpop.f32.mrb[0].mxu0
    %1066 = vdwg.mxu0
    %1067 = vmatprep.subr.bf16.mxu0 %v835
    %1068 = vmatpush1.bf16.msra.mxu0 %v834
    %1069 = vmatprep.subr.bf16.mxu0 %v839
    %1070 = vmatpush1.bf16.msra.mxu0 %v838
    %1071 = vmatprep.subr.bf16.mxu0 %v843
    %1072 = vmatpush1.bf16.msra.mxu0 %v842
    %1073 = vmatprep.subr.bf16.mxu0 %v847
    %1074 = vmatpush1.bf16.msra.mxu0 %v846
    %1075 = vmatprep.subr.bf16.mxu0 %v851
    %1076 = vmatpush1.bf16.msra.mxu0 %v850
    %1077 = vmatprep.subr.bf16.mxu0 %v855
    %1078 = vmatpush1.bf16.msra.mxu0 %v854
    %1079 = vmatprep.subr.bf16.mxu0 %v859
    %1080 = vmatpush1.bf16.msra.mxu0 %v858
    %1081 = vmatprep.subr.bf16.mxu0 %v863
    %1082 = vmatpush1.bf16.msra.mxu0 %v862
    %1083 = vmatprep.subr.bf16.mxu0 %v867
    %1084 = vmatpush1.bf16.msra.mxu0 %v866
    %1085 = vmatprep.subr.bf16.mxu0 %v871
    %1086 = vmatpush1.bf16.msra.mxu0 %v870
    %1087 = vmatprep.subr.bf16.mxu0 %v875
    %1088 = vmatpush1.bf16.msra.mxu0 %v874
    %1089 = vmatprep.subr.bf16.mxu0 %v879
    %1090 = vmatpush1.bf16.msra.mxu0 %v878
    %1091 = vmatprep.subr.bf16.mxu0 %v883
    %1092 = vmatpush1.bf16.msra.mxu0 %v882
    %1093 = vmatprep.subr.bf16.mxu0 %v887
    %1094 = vmatpush1.bf16.msra.mxu0 %v886
    %1095 = vmatprep.subr.bf16.mxu0 %v891
    %1096 = vmatpush1.bf16.msra.mxu0 %v890
    %1097 = vmatprep.subr.bf16.mxu0 %v895
    %1098 = vmatpush1.bf16.msra.mxu0 %v894
    %1099 = vmatprep.mubr.bf16.mxu0 %v235
    %1100 = vmatmul.mubr.bf16.gmra.mrb[0].mxu0 %v234
    %v1101 = vpop.f32.mrb[0].mxu0
    %v1102 = vadd.f32 %v1061, %v1101
    %v1103 = vpop.f32.mrb[0].mxu0
    %v1104 = vadd.f32 %v1063, %v1103
    %v1105 = vpop.f32.mrb[0].mxu0
    %v1106 = vpop.f32.mrb[0].mxu0
    %1107 = vdwg.mxu0
    %1108 = vmatprep.subr.bf16.mxu0 %v773
    %1109 = vmatpush1.bf16.msra.mxu0 %v772
    %1110 = vmatprep.subr.bf16.mxu0 %v777
    %1111 = vmatpush1.bf16.msra.mxu0 %v776
    %1112 = vmatprep.subr.bf16.mxu0 %v781
    %1113 = vmatpush1.bf16.msra.mxu0 %v780
    %1114 = vmatprep.subr.bf16.mxu0 %v785
    %1115 = vmatpush1.bf16.msra.mxu0 %v784
    %1116 = vmatprep.subr.bf16.mxu0 %v789
    %1117 = vmatpush1.bf16.msra.mxu0 %v788
    %1118 = vmatprep.subr.bf16.mxu0 %v793
    %1119 = vmatpush1.bf16.msra.mxu0 %v792
    %1120 = vmatprep.subr.bf16.mxu0 %v797
    %1121 = vmatpush1.bf16.msra.mxu0 %v796
    %1122 = vmatprep.subr.bf16.mxu0 %v801
    %1123 = vmatpush1.bf16.msra.mxu0 %v800
    %1124 = vmatprep.subr.bf16.mxu0 %v805
    %1125 = vmatpush1.bf16.msra.mxu0 %v804
    %1126 = vmatprep.subr.bf16.mxu0 %v809
    %1127 = vmatpush1.bf16.msra.mxu0 %v808
    %1128 = vmatprep.subr.bf16.mxu0 %v813
    %1129 = vmatpush1.bf16.msra.mxu0 %v812
    %1130 = vmatprep.subr.bf16.mxu0 %v817
    %1131 = vmatpush1.bf16.msra.mxu0 %v816
    %1132 = vmatprep.subr.bf16.mxu0 %v821
    %1133 = vmatpush1.bf16.msra.mxu0 %v820
    %1134 = vmatprep.subr.bf16.mxu0 %v825
    %1135 = vmatpush1.bf16.msra.mxu0 %v824
    %1136 = vmatprep.subr.bf16.mxu0 %v829
    %1137 = vmatpush1.bf16.msra.mxu0 %v828
    %1138 = vmatprep.subr.bf16.mxu0 %v833
    %1139 = vmatpush1.bf16.msra.mxu0 %v832
    %1140 = vmatprep.mubr.bf16.mxu0 %v233
    %1141 = vmatmul.mubr.bf16.gmra.mrb[0].mxu0 %v232
    %v1142 = vpop.f32.mrb[0].mxu0
    %v1143 = vadd.f32 %v377, %v1142
    %v1144 = vpop.f32.mrb[0].mxu0
    %v1145 = vadd.f32 %v381, %v1144
    %v1146 = vpop.f32.mrb[0].mxu0
    %v1147 = vpop.f32.mrb[0].mxu0
    %1148 = vdwg.mxu0
    %1149 = vmatprep.subr.bf16.mxu0 %v837
    %1150 = vmatpush1.bf16.msra.mxu0 %v836
    %1151 = vmatprep.subr.bf16.mxu0 %v841
    %1152 = vmatpush1.bf16.msra.mxu0 %v840
    %1153 = vmatprep.subr.bf16.mxu0 %v845
    %1154 = vmatpush1.bf16.msra.mxu0 %v844
    %1155 = vmatprep.subr.bf16.mxu0 %v849
    %1156 = vmatpush1.bf16.msra.mxu0 %v848
    %1157 = vmatprep.subr.bf16.mxu0 %v853
    %1158 = vmatpush1.bf16.msra.mxu0 %v852
    %1159 = vmatprep.subr.bf16.mxu0 %v857
    %1160 = vmatpush1.bf16.msra.mxu0 %v856
    %1161 = vmatprep.subr.bf16.mxu0 %v861
    %1162 = vmatpush1.bf16.msra.mxu0 %v860
    %1163 = vmatprep.subr.bf16.mxu0 %v865
    %1164 = vmatpush1.bf16.msra.mxu0 %v864
    %1165 = vmatprep.subr.bf16.mxu0 %v869
    %1166 = vmatpush1.bf16.msra.mxu0 %v868
    %1167 = vmatprep.subr.bf16.mxu0 %v873
    %1168 = vmatpush1.bf16.msra.mxu0 %v872
    %1169 = vmatprep.subr.bf16.mxu0 %v877
    %1170 = vmatpush1.bf16.msra.mxu0 %v876
    %1171 = vmatprep.subr.bf16.mxu0 %v881
    %1172 = vmatpush1.bf16.msra.mxu0 %v880
    %1173 = vmatprep.subr.bf16.mxu0 %v885
    %1174 = vmatpush1.bf16.msra.mxu0 %v884
    %1175 = vmatprep.subr.bf16.mxu0 %v889
    %1176 = vmatpush1.bf16.msra.mxu0 %v888
    %1177 = vmatprep.subr.bf16.mxu0 %v893
    %1178 = vmatpush1.bf16.msra.mxu0 %v892
    %1179 = vmatprep.subr.bf16.mxu0 %v897
    %1180 = vmatpush1.bf16.msra.mxu0 %v896
    %1181 = vmatprep.mubr.bf16.mxu0 %v235
    %1182 = vmatmul.mubr.bf16.gmra.mrb[0].mxu0 %v234
    %v1183 = vpop.f32.mrb[0].mxu0
    %v1184 = vadd.f32 %v1143, %v1183
    %v1185 = vpop.f32.mrb[0].mxu0
    %v1186 = vadd.f32 %v1145, %v1185
    %v1187 = vpop.f32.mrb[0].mxu0
    %v1188 = vpop.f32.mrb[0].mxu0
    %1189 = vdwg.mxu0
    %v1190 = vmax.f32 %v1102, 0.0
    %v1191 = vmax.f32 %v1104, 0.0
    %v1192 = vmax.f32 %v1184, 0.0
    %v1193 = vmax.f32 %v1186, 0.0
    %v1194 = vpack.c.bf16 %v1190, %v1190
    %v1195 = vpack.c.bf16 %v1191, %v1191
    %v1196 = vpack.c.bf16 %v1192, %v1192
    %v1197 = vpack.c.bf16 %v1193, %v1193
    %v1198 = vld [vmem:[#allocation6] sm:$0xf]
    %v1199 = vld [vmem:[#allocation6 + $0x4] sm:$0xf]
    %v1200 = vld [vmem:[#allocation6 + $0x8] sm:$0xf]
    %v1201 = vld [vmem:[#allocation6 + $0xc] sm:$0xf]
    %v1202 = vld [vmem:[#allocation6 + $0x10] sm:$0xf]
    %v1203 = vld [vmem:[#allocation6 + $0x14] sm:$0xf]
    %v1204 = vld [vmem:[#allocation6 + $0x18] sm:$0xf]
    %v1205 = vld [vmem:[#allocation6 + $0x1c] sm:$0xf]
    %v1206 = vld [vmem:[#allocation6 + $0x20] sm:$0xf]
    %v1207 = vld [vmem:[#allocation6 + $0x24] sm:$0xf]
    %v1208 = vld [vmem:[#allocation6 + $0x28] sm:$0xf]
    %v1209 = vld [vmem:[#allocation6 + $0x2c] sm:$0xf]
    %v1210 = vld [vmem:[#allocation6 + $0x30] sm:$0xf]
    %v1211 = vld [vmem:[#allocation6 + $0x34] sm:$0xf]
    %v1212 = vld [vmem:[#allocation6 + $0x38] sm:$0xf]
    %v1213 = vld [vmem:[#allocation6 + $0x3c] sm:$0xf]
    %v1214 = vld [vmem:[#allocation6 + $0x40] sm:$0xf]
    %v1215 = vld [vmem:[#allocation6 + $0x44] sm:$0xf]
    %v1216 = vld [vmem:[#allocation6 + $0x48] sm:$0xf]
    %v1217 = vld [vmem:[#allocation6 + $0x4c] sm:$0xf]
    %v1218 = vld [vmem:[#allocation6 + $0x50] sm:$0xf]
    %v1219 = vld [vmem:[#allocation6 + $0x54] sm:$0xf]
    %v1220 = vld [vmem:[#allocation6 + $0x58] sm:$0xf]
    %v1221 = vld [vmem:[#allocation6 + $0x5c] sm:$0xf]
    %v1222 = vld [vmem:[#allocation6 + $0x60] sm:$0xf]
    %v1223 = vld [vmem:[#allocation6 + $0x64] sm:$0xf]
    %v1224 = vld [vmem:[#allocation6 + $0x68] sm:$0xf]
    %v1225 = vld [vmem:[#allocation6 + $0x6c] sm:$0xf]
    %v1226 = vld [vmem:[#allocation6 + $0x70] sm:$0xf]
    %v1227 = vld [vmem:[#allocation6 + $0x74] sm:$0xf]
    %v1228 = vld [vmem:[#allocation6 + $0x78] sm:$0xf]
    %v1229 = vld [vmem:[#allocation6 + $0x7c] sm:$0xf]
    %v1230 = vld [vmem:[#allocation6 + $0x80] sm:$0xf]
    %v1231 = vld [vmem:[#allocation6 + $0x84] sm:$0xf]
    %v1232 = vld [vmem:[#allocation6 + $0x88] sm:$0xf]
    %v1233 = vld [vmem:[#allocation6 + $0x8c] sm:$0xf]
    %v1234 = vld [vmem:[#allocation6 + $0x90] sm:$0xf]
    %v1235 = vld [vmem:[#allocation6 + $0x94] sm:$0xf]
    %v1236 = vld [vmem:[#allocation6 + $0x98] sm:$0xf]
    %v1237 = vld [vmem:[#allocation6 + $0x9c] sm:$0xf]
    %v1238 = vld [vmem:[#allocation6 + $0xa0] sm:$0xf]
    %v1239 = vld [vmem:[#allocation6 + $0xa4] sm:$0xf]
    %v1240 = vld [vmem:[#allocation6 + $0xa8] sm:$0xf]
    %v1241 = vld [vmem:[#allocation6 + $0xac] sm:$0xf]
    %v1242 = vld [vmem:[#allocation6 + $0xb0] sm:$0xf]
    %v1243 = vld [vmem:[#allocation6 + $0xb4] sm:$0xf]
    %v1244 = vld [vmem:[#allocation6 + $0xb8] sm:$0xf]
    %v1245 = vld [vmem:[#allocation6 + $0xbc] sm:$0xf]
    %v1246 = vld [vmem:[#allocation6 + $0xc0] sm:$0xf]
    %v1247 = vld [vmem:[#allocation6 + $0xc4] sm:$0xf]
    %v1248 = vld [vmem:[#allocation6 + $0xc8] sm:$0xf]
    %v1249 = vld [vmem:[#allocation6 + $0xcc] sm:$0xf]
    %v1250 = vld [vmem:[#allocation6 + $0xd0] sm:$0xf]
    %v1251 = vld [vmem:[#allocation6 + $0xd4] sm:$0xf]
    %v1252 = vld [vmem:[#allocation6 + $0xd8] sm:$0xf]
    %v1253 = vld [vmem:[#allocation6 + $0xdc] sm:$0xf]
    %v1254 = vld [vmem:[#allocation6 + $0xe0] sm:$0xf]
    %v1255 = vld [vmem:[#allocation6 + $0xe4] sm:$0xf]
    %v1256 = vld [vmem:[#allocation6 + $0xe8] sm:$0xf]
    %v1257 = vld [vmem:[#allocation6 + $0xec] sm:$0xf]
    %v1258 = vld [vmem:[#allocation6 + $0xf0] sm:$0xf]
    %v1259 = vld [vmem:[#allocation6 + $0xf4] sm:$0xf]
    %v1260 = vld [vmem:[#allocation6 + $0xf8] sm:$0xf]
    %v1261 = vld [vmem:[#allocation6 + $0xfc] sm:$0xf]
    %v1262 = vld [vmem:[%s6] sm:$0x1]
    %v1264 = vlaneseq
    %v1265 = vshrl.u32 %v1264, 7
    %v1266 = vsub.s32 0, %v1265
    %v1267 = vrot.slane %v1262, %v1266
    %v1333 = vunpack.c.l.b16 %v1198
    %v1334 = vunpack.c.l.b16 %v1199
    %v1335 = vunpack.c.l.b16 %v1200
    %v1336 = vunpack.c.l.b16 %v1201
    %v1337 = vunpack.c.l.b16 %v1202
    %v1338 = vunpack.c.l.b16 %v1203
    %v1339 = vunpack.c.l.b16 %v1204
    %v1340 = vunpack.c.l.b16 %v1205
    %v1341 = vunpack.c.l.b16 %v1206
    %v1342 = vunpack.c.l.b16 %v1207
    %v1343 = vunpack.c.l.b16 %v1208
    %v1344 = vunpack.c.l.b16 %v1209
    %v1345 = vunpack.c.l.b16 %v1210
    %v1346 = vunpack.c.l.b16 %v1211
    %v1347 = vunpack.c.l.b16 %v1212
    %v1348 = vunpack.c.l.b16 %v1213
    %v1349 = vunpack.c.l.b16 %v1214
    %v1350 = vunpack.c.l.b16 %v1215
    %v1351 = vunpack.c.l.b16 %v1216
    %v1352 = vunpack.c.l.b16 %v1217
    %v1353 = vunpack.c.l.b16 %v1218
    %v1354 = vunpack.c.l.b16 %v1219
    %v1355 = vunpack.c.l.b16 %v1220
    %v1356 = vunpack.c.l.b16 %v1221
    %v1357 = vunpack.c.l.b16 %v1222
    %v1358 = vunpack.c.l.b16 %v1223
    %v1359 = vunpack.c.l.b16 %v1224
    %v1360 = vunpack.c.l.b16 %v1225
    %v1361 = vunpack.c.l.b16 %v1226
    %v1362 = vunpack.c.l.b16 %v1227
    %v1363 = vunpack.c.l.b16 %v1228
    %v1364 = vunpack.c.l.b16 %v1229
    %v1365 = vunpack.c.l.b16 %v1230
    %v1366 = vunpack.c.l.b16 %v1231
    %v1367 = vunpack.c.l.b16 %v1232
    %v1368 = vunpack.c.l.b16 %v1233
    %v1369 = vunpack.c.l.b16 %v1234
    %v1370 = vunpack.c.l.b16 %v1235
    %v1371 = vunpack.c.l.b16 %v1236
    %v1372 = vunpack.c.l.b16 %v1237
    %v1373 = vunpack.c.l.b16 %v1238
    %v1374 = vunpack.c.l.b16 %v1239
    %v1375 = vunpack.c.l.b16 %v1240
    %v1376 = vunpack.c.l.b16 %v1241
    %v1377 = vunpack.c.l.b16 %v1242
    %v1378 = vunpack.c.l.b16 %v1243
    %v1379 = vunpack.c.l.b16 %v1244
    %v1380 = vunpack.c.l.b16 %v1245
    %v1381 = vunpack.c.l.b16 %v1246
    %v1382 = vunpack.c.l.b16 %v1247
    %v1383 = vunpack.c.l.b16 %v1248
    %v1384 = vunpack.c.l.b16 %v1249
    %v1385 = vunpack.c.l.b16 %v1250
    %v1386 = vunpack.c.l.b16 %v1251
    %v1387 = vunpack.c.l.b16 %v1252
    %v1388 = vunpack.c.l.b16 %v1253
    %v1389 = vunpack.c.l.b16 %v1254
    %v1390 = vunpack.c.l.b16 %v1255
    %v1391 = vunpack.c.l.b16 %v1256
    %v1392 = vunpack.c.l.b16 %v1257
    %v1393 = vunpack.c.l.b16 %v1258
    %v1394 = vunpack.c.l.b16 %v1259
    %v1395 = vunpack.c.l.b16 %v1260
    %v1396 = vunpack.c.l.b16 %v1261
    %v1397 = vpack.c.b16 %v1334, %v1333
    %v1398 = vpack.c.b16 %v1336, %v1335
    %v1399 = vpack.c.b16 %v1338, %v1337
    %v1400 = vpack.c.b16 %v1340, %v1339
    %v1401 = vpack.c.b16 %v1342, %v1341
    %v1402 = vpack.c.b16 %v1344, %v1343
    %v1403 = vpack.c.b16 %v1346, %v1345
    %v1404 = vpack.c.b16 %v1348, %v1347
    %v1405 = vpack.c.b16 %v1350, %v1349
    %v1406 = vpack.c.b16 %v1352, %v1351
    %v1407 = vpack.c.b16 %v1354, %v1353
    %v1408 = vpack.c.b16 %v1356, %v1355
    %v1409 = vpack.c.b16 %v1358, %v1357
    %v1410 = vpack.c.b16 %v1360, %v1359
    %v1411 = vpack.c.b16 %v1362, %v1361
    %v1412 = vpack.c.b16 %v1364, %v1363
    %v1413 = vpack.c.b16 %v1366, %v1365
    %v1414 = vpack.c.b16 %v1368, %v1367
    %v1415 = vpack.c.b16 %v1370, %v1369
    %v1416 = vpack.c.b16 %v1372, %v1371
    %v1417 = vpack.c.b16 %v1374, %v1373
    %v1418 = vpack.c.b16 %v1376, %v1375
    %v1419 = vpack.c.b16 %v1378, %v1377
    %v1420 = vpack.c.b16 %v1380, %v1379
    %v1421 = vpack.c.b16 %v1382, %v1381
    %v1422 = vpack.c.b16 %v1384, %v1383
    %v1423 = vpack.c.b16 %v1386, %v1385
    %v1424 = vpack.c.b16 %v1388, %v1387
    %v1425 = vpack.c.b16 %v1390, %v1389
    %v1426 = vpack.c.b16 %v1392, %v1391
    %v1427 = vpack.c.b16 %v1394, %v1393
    %v1428 = vpack.c.b16 %v1396, %v1395
    %1461 = vmatprep.subr.bf16.mxu0 0
    %1462 = vmatpush1.bf16.msra.mxu0 %v1397
    %1463 = vmatprep.subr.bf16.mxu0 0
    %1464 = vmatpush1.bf16.msra.mxu0 %v1398
    %1465 = vmatprep.subr.bf16.mxu0 0
    %1466 = vmatpush1.bf16.msra.mxu0 %v1399
    %1467 = vmatprep.subr.bf16.mxu0 0
    %1468 = vmatpush1.bf16.msra.mxu0 %v1400
    %1469 = vmatprep.subr.bf16.mxu0 0
    %1470 = vmatpush1.bf16.msra.mxu0 %v1401
    %1471 = vmatprep.subr.bf16.mxu0 0
    %1472 = vmatpush1.bf16.msra.mxu0 %v1402
    %1473 = vmatprep.subr.bf16.mxu0 0
    %1474 = vmatpush1.bf16.msra.mxu0 %v1403
    %1475 = vmatprep.subr.bf16.mxu0 0
    %1476 = vmatpush1.bf16.msra.mxu0 %v1404
    %1477 = vmatprep.subr.bf16.mxu0 0
    %1478 = vmatpush1.bf16.msra.mxu0 %v1405
    %1479 = vmatprep.subr.bf16.mxu0 0
    %1480 = vmatpush1.bf16.msra.mxu0 %v1406
    %1481 = vmatprep.subr.bf16.mxu0 0
    %1482 = vmatpush1.bf16.msra.mxu0 %v1407
    %1483 = vmatprep.subr.bf16.mxu0 0
    %1484 = vmatpush1.bf16.msra.mxu0 %v1408
    %1485 = vmatprep.subr.bf16.mxu0 0
    %1486 = vmatpush1.bf16.msra.mxu0 %v1409
    %1487 = vmatprep.subr.bf16.mxu0 0
    %1488 = vmatpush1.bf16.msra.mxu0 %v1410
    %1489 = vmatprep.subr.bf16.mxu0 0
    %1490 = vmatpush1.bf16.msra.mxu0 %v1411
    %1491 = vmatprep.subr.bf16.mxu0 0
    %1492 = vmatpush1.bf16.msra.mxu0 %v1412
    %1493 = vmatprep.mubr.bf16.mxu0 %v1195
    %1494 = vmatmul.mubr.bf16.gmra.mrb[0].mxu0 %v1194
    %v1495 = vpop.f32.mrb[0].mxu0
    %v1496 = vadd.f32 %v1267, %v1495
    %v1497 = vpop.f32.mrb[0].mxu0
    %v1498 = vpop.f32.mrb[0].mxu0
    %v1499 = vpop.f32.mrb[0].mxu0
    %1500 = vdwg.mxu0
    %1501 = vmatprep.subr.bf16.mxu0 0
    %1502 = vmatpush1.bf16.msra.mxu0 %v1413
    %1503 = vmatprep.subr.bf16.mxu0 0
    %1504 = vmatpush1.bf16.msra.mxu0 %v1414
    %1505 = vmatprep.subr.bf16.mxu0 0
    %1506 = vmatpush1.bf16.msra.mxu0 %v1415
    %1507 = vmatprep.subr.bf16.mxu0 0
    %1508 = vmatpush1.bf16.msra.mxu0 %v1416
    %1509 = vmatprep.subr.bf16.mxu0 0
    %1510 = vmatpush1.bf16.msra.mxu0 %v1417
    %1511 = vmatprep.subr.bf16.mxu0 0
    %1512 = vmatpush1.bf16.msra.mxu0 %v1418
    %1513 = vmatprep.subr.bf16.mxu0 0
    %1514 = vmatpush1.bf16.msra.mxu0 %v1419
    %1515 = vmatprep.subr.bf16.mxu0 0
    %1516 = vmatpush1.bf16.msra.mxu0 %v1420
    %1517 = vmatprep.subr.bf16.mxu0 0
    %1518 = vmatpush1.bf16.msra.mxu0 %v1421
    %1519 = vmatprep.subr.bf16.mxu0 0
    %1520 = vmatpush1.bf16.msra.mxu0 %v1422
    %1521 = vmatprep.subr.bf16.mxu0 0
    %1522 = vmatpush1.bf16.msra.mxu0 %v1423
    %1523 = vmatprep.subr.bf16.mxu0 0
    %1524 = vmatpush1.bf16.msra.mxu0 %v1424
    %1525 = vmatprep.subr.bf16.mxu0 0
    %1526 = vmatpush1.bf16.msra.mxu0 %v1425
    %1527 = vmatprep.subr.bf16.mxu0 0
    %1528 = vmatpush1.bf16.msra.mxu0 %v1426
    %1529 = vmatprep.subr.bf16.mxu0 0
    %1530 = vmatpush1.bf16.msra.mxu0 %v1427
    %1531 = vmatprep.subr.bf16.mxu0 0
    %1532 = vmatpush1.bf16.msra.mxu0 %v1428
    %1533 = vmatprep.mubr.bf16.mxu0 %v1197
    %1534 = vmatmul.mubr.bf16.gmra.mrb[0].mxu0 %v1196
    %v1535 = vpop.f32.mrb[0].mxu0
    %v1536 = vadd.f32 %v1496, %v1535
    %v1537 = vpop.f32.mrb[0].mxu0
    %v1538 = vpop.f32.mrb[0].mxu0
    %v1539 = vpop.f32.mrb[0].mxu0
    %1540 = vdwg.mxu0
    %v1541 = vmax.f32 %v1536, 0.0
    %v1542 = vpack.c.bf16 %v1541, %v1541
    %v1543 = vld [vmem:[%s7] sm:$0xf]
    %v1544 = vld [vmem:[%s7 + $0x4] sm:$0xf]
    %v1545 = vld [vmem:[%s7 + $0x8] sm:$0xf]
    %v1546 = vld [vmem:[%s7 + $0xc] sm:$0xf]
    %v1547 = vld [vmem:[%s7 + $0x10] sm:$0xf]
    %v1548 = vld [vmem:[%s7 + $0x14] sm:$0xf]
    %v1549 = vld [vmem:[%s7 + $0x18] sm:$0xf]
    %v1550 = vld [vmem:[%s7 + $0x1c] sm:$0xf]
    %v1551 = vld [vmem:[%s7 + $0x20] sm:$0xf]
    %v1552 = vld [vmem:[%s7 + $0x24] sm:$0xf]
    %v1553 = vld [vmem:[%s7 + $0x28] sm:$0xf]
    %v1554 = vld [vmem:[%s7 + $0x2c] sm:$0xf]
    %v1555 = vld [vmem:[%s7 + $0x30] sm:$0xf]
    %v1556 = vld [vmem:[%s7 + $0x34] sm:$0xf]
    %v1557 = vld [vmem:[%s7 + $0x38] sm:$0xf]
    %v1558 = vld [vmem:[%s7 + $0x3c] sm:$0xf]
    %v1559 = vld [vmem:[%s8] sm:$0x1]
    %v1561 = vlaneseq
    %v1562 = vshrl.u32 %v1561, 7
    %v1563 = vsub.s32 0, %v1562
    %v1564 = vrot.slane %v1559, %v1563
    %v1582 = vunpack.c.l.b16 %v1543
    %v1583 = vunpack.c.l.b16 %v1544
    %v1584 = vunpack.c.l.b16 %v1545
    %v1585 = vunpack.c.l.b16 %v1546
    %v1586 = vunpack.c.l.b16 %v1547
    %v1587 = vunpack.c.l.b16 %v1548
    %v1588 = vunpack.c.l.b16 %v1549
    %v1589 = vunpack.c.l.b16 %v1550
    %v1590 = vunpack.c.l.b16 %v1551
    %v1591 = vunpack.c.l.b16 %v1552
    %v1592 = vunpack.c.l.b16 %v1553
    %v1593 = vunpack.c.l.b16 %v1554
    %v1594 = vunpack.c.l.b16 %v1555
    %v1595 = vunpack.c.l.b16 %v1556
    %v1596 = vunpack.c.l.b16 %v1557
    %v1597 = vunpack.c.l.b16 %v1558
    %v1598 = vpack.c.b16 %v1583, %v1582
    %v1599 = vpack.c.b16 %v1585, %v1584
    %v1600 = vpack.c.b16 %v1587, %v1586
    %v1601 = vpack.c.b16 %v1589, %v1588
    %v1602 = vpack.c.b16 %v1591, %v1590
    %v1603 = vpack.c.b16 %v1593, %v1592
    %v1604 = vpack.c.b16 %v1595, %v1594
    %v1605 = vpack.c.b16 %v1597, %v1596
    %1614 = vmatprep.subr.bf16.mxu0 0
    %1615 = vmatpush1.bf16.msra.mxu0 %v1598
    %1616 = vmatprep.subr.bf16.mxu0 0
    %1617 = vmatpush1.bf16.msra.mxu0 %v1599
    %1618 = vmatprep.subr.bf16.mxu0 0
    %1619 = vmatpush1.bf16.msra.mxu0 %v1600
    %1620 = vmatprep.subr.bf16.mxu0 0
    %1621 = vmatpush1.bf16.msra.mxu0 %v1601
    %1622 = vmatprep.subr.bf16.mxu0 0
    %1623 = vmatpush1.bf16.msra.mxu0 %v1602
    %1624 = vmatprep.subr.bf16.mxu0 0
    %1625 = vmatpush1.bf16.msra.mxu0 %v1603
    %1626 = vmatprep.subr.bf16.mxu0 0
    %1627 = vmatpush1.bf16.msra.mxu0 %v1604
    %1628 = vmatprep.subr.bf16.mxu0 0
    %1629 = vmatpush1.bf16.msra.mxu0 %v1605
    %1630 = vmatprep.subr.bf16.mxu0 0
    %1631 = vmatpush1.bf16.msra.mxu0 0
    %1632 = vmatprep.subr.bf16.mxu0 0
    %1633 = vmatpush1.bf16.msra.mxu0 0
    %1634 = vmatprep.subr.bf16.mxu0 0
    %1635 = vmatpush1.bf16.msra.mxu0 0
    %1636 = vmatprep.subr.bf16.mxu0 0
    %1637 = vmatpush1.bf16.msra.mxu0 0
    %1638 = vmatprep.subr.bf16.mxu0 0
    %1639 = vmatpush1.bf16.msra.mxu0 0
    %1640 = vmatprep.subr.bf16.mxu0 0
    %1641 = vmatpush1.bf16.msra.mxu0 0
    %1642 = vmatprep.subr.bf16.mxu0 0
    %1643 = vmatpush1.bf16.msra.mxu0 0
    %1644 = vmatprep.subr.bf16.mxu0 0
    %1645 = vmatpush1.bf16.msra.mxu0 0
    %1646 = vmatprep.mubr.bf16.mxu0 0
    %1647 = vmatmul.mubr.bf16.gmra.mrb[0].mxu0 %v1542
    %v1648 = vpop.f32.mrb[0].mxu0
    %v1649 = vadd.f32 %v1564, %v1648
    %v1650 = vpop.f32.mrb[0].mxu0
    %v1651 = vpop.f32.mrb[0].mxu0
    %v1652 = vpop.f32.mrb[0].mxu0
    %1653 = vdwg.mxu0
    %v1654 = vmax.f32 %v1649, 0.0
    %v1655 = vld [vmem:[%s9] sm:$0x1]
    %v1656 = vpack.c.bf16 %v1654, %v1654
    %v1657 = vld [vmem:[#allocation2] sm:$0x1]
    %1659 = vset.pattern.permute.xlu0 0
    %1660 = vperm.xlu0 %1659, %v1657
    %v1661 = vpop.permute.xlu0 %1660
    %v1663 = vlaneseq
    %v1664 = vshrl.u32 %v1663, 7
    %v1665 = vsub.s32 0, %v1664
    %v1666 = vrot.slane %v1661, %v1665
    %vm1667 = vcmask 523264
    %v1669 = vsel %vm1667, %v1655, 0
    %v1672 = vsel %vm1667, %v1656, 0
    %1674 = vmatprep.subr.bf16.mxu0 0
    %1675 = vmatpush1.bf16.xpose.msra.mxu0 %v1672
    %1676 = vmatprep.subr.bf16.mxu0 0
    %1677 = vmatpush1.bf16.xpose.msra.mxu0 0
    %1678 = vmatprep.subr.bf16.mxu0 0
    %1679 = vmatpush1.bf16.xpose.msra.mxu0 0
    %1680 = vmatprep.subr.bf16.mxu0 0
    %1681 = vmatpush1.bf16.xpose.msra.mxu0 0
    %1682 = vmatprep.subr.bf16.mxu0 0
    %1683 = vmatpush1.bf16.xpose.msra.mxu0 0
    %1684 = vmatprep.subr.bf16.mxu0 0
    %1685 = vmatpush1.bf16.xpose.msra.mxu0 0
    %1686 = vmatprep.subr.bf16.mxu0 0
    %1687 = vmatpush1.bf16.xpose.msra.mxu0 0
    %1688 = vmatprep.subr.bf16.mxu0 0
    %1689 = vmatpush1.bf16.xpose.msra.mxu0 0
    %1690 = vmatprep.subr.bf16.mxu0 0
    %1691 = vmatpush1.bf16.xpose.msra.mxu0 0
    %1692 = vmatprep.subr.bf16.mxu0 0
    %1693 = vmatpush1.bf16.xpose.msra.mxu0 0
    %1694 = vmatprep.subr.bf16.mxu0 0
    %1695 = vmatpush1.bf16.xpose.msra.mxu0 0
    %1696 = vmatprep.subr.bf16.mxu0 0
    %1697 = vmatpush1.bf16.xpose.msra.mxu0 0
    %1698 = vmatprep.subr.bf16.mxu0 0
    %1699 = vmatpush1.bf16.xpose.msra.mxu0 0
    %1700 = vmatprep.subr.bf16.mxu0 0
    %1701 = vmatpush1.bf16.xpose.msra.mxu0 0
    %1702 = vmatprep.subr.bf16.mxu0 0
    %1703 = vmatpush1.bf16.xpose.msra.mxu0 0
    %1704 = vmatprep.subr.bf16.mxu0 0
    %1705 = vmatpush1.bf16.xpose.msra.mxu0 0
    %1706 = vmatprep.mubr.bf16.mxu0 0
    %1707 = vmatmul.mubr.bf16.gmra.mrb[0].mxu0 %v1669
    %v1708 = vpop.f32.mrb[0].mxu0
    %v1709 = vadd.f32 %v1666, %v1708
    %v1710 = vpop.f32.mrb[0].mxu0
    %v1711 = vpop.f32.mrb[0].mxu0
    %v1712 = vpop.f32.mrb[0].mxu0
    %1713 = vdwg.mxu0
    %vm1714 = vcmask 57344
    %1715 = vst.msk [vmem:[#allocation8] sm:$0x1] %vm1714, %v1709
    // Predicated region
    $region54: #{tpu_custom_call.1} parent=1 // pred_check
      _
    $region55: #{tpu_custom_call.1} parent=1 // pred_check_branch
      %1717 = sbr.rel (0) target = $region57
    $region56: #{tpu_custom_call.1} parent=1 // pred_region
      %s1719 = ssub.s32 16, 16
      %1720 = vsyncadd [#allocation5], %s1719
      %s1722 = sshll.u32 [#allocation8], 4
      %s1723 = int_to_ptr.vmem [resolvable:$true] %s1722
      %1725 = dma.vmem_to_hbm [thread:$0]  %s1723, 16, %s11, [#allocation5]
    $region57: #{tpu_custom_call.1} parent=1 // pred_fallthru
      _
    // Predicated region
    $region58: #{tpu_custom_call.1} parent=1 // pred_check
      _
    $region59: #{tpu_custom_call.1} parent=1 // pred_check_branch
      %1727 = sbr.rel (0) target = $region61
    $region60: #{tpu_custom_call.1} parent=1 // pred_region
      %1728 = dma.done [#allocation5], 16
    $region61: #{tpu_custom_call.1} parent=1 // pred_fallthru
      _
    %1729 = vsyncpa [#allocation4], 1
    %1730 = vsyncpa [#allocation7], 1
    %1731 = vsyncpa [#allocation5], 1

</llo_original>
